<compile_context>
chip_gen: v6e
topology: v6e:2x2x1
jax: 0.10.0
libtpu: 0.0.40
codegen_flags: <defaults>
</compile_context>

<pallas_src>
import functools

import jax
import jax.numpy as jnp
from jax.experimental import pallas as pl
from jax.experimental.pallas import tpu as pltpu


def _random_shift_kernel(shift_ref, x_ref, o_ref, tmp_ref, *, pad, b_blk):
    # shift_ref: (2 * N,) int32 in SMEM, layout [sx0, sy0, sx1, sy1, ...]
    # x_ref:     (b_blk, c, h, w) unpadded input block (VMEM)
    # o_ref:     (b_blk, c, h, w) output block (VMEM)
    # tmp_ref:   (c, h, w) per-sample staging scratch (VMEM)
    g = pl.program_id(0)
    _, c, h, w = o_ref.shape
    n_shift = 2 * pad + 1

    def body(i, carry):
        b = g * b_blk + i
        # Clamp so exactly one branch fires even for out-of-range shifts.
        sx = jnp.clip(shift_ref[2 * b], 0, 2 * pad)      # width shift
        sy = jnp.clip(shift_ref[2 * b + 1], 0, 2 * pad)  # height shift

        # ---- Stage 1: height shift with edge replication, x_ref[i] -> tmp ----
        # tmp[r] = x[clamp(r + dy, 0, h-1)],  dy = sy - pad
        for s in range(n_shift):
            dy = s - pad

            @pl.when(sy == s)
            def _(dy=dy):
                if dy > 0:
                    tmp_ref[:, : h - dy, :] = x_ref[i, :, dy:, :]
                    tmp_ref[:, h - dy :, :] = jnp.broadcast_to(
                        x_ref[i, :, h - 1 : h, :], (c, dy, w))
                elif dy < 0:
                    k = -dy
                    tmp_ref[:, k:, :] = x_ref[i, :, : h - k, :]
                    tmp_ref[:, :k, :] = jnp.broadcast_to(
                        x_ref[i, :, 0:1, :], (c, k, w))
                else:
                    tmp_ref[...] = x_ref[i]

        # ---- Stage 2: width shift with edge replication, tmp -> o_ref[i] ----
        # out[j] = tmp[clamp(j + dx, 0, w-1)],  dx = sx - pad
        for s in range(n_shift):
            dx = s - pad

            @pl.when(sx == s)
            def _(dx=dx):
                if dx > 0:
                    o_ref[i, :, :, : w - dx] = tmp_ref[:, :, dx:]
                    o_ref[i, :, :, w - dx :] = jnp.broadcast_to(
                        tmp_ref[:, :, w - 1 : w], (c, h, dx))
                elif dx < 0:
                    k = -dx
                    o_ref[i, :, :, k:] = tmp_ref[:, :, : w - k]
                    o_ref[i, :, :, :k] = jnp.broadcast_to(
                        tmp_ref[:, :, 0:1], (c, h, k))
                else:
                    o_ref[i] = tmp_ref[...]

        return carry

    if b_blk == 1:
        body(0, 0)
    else:
        jax.lax.fori_loop(0, b_blk, body, 0)


def _pick_block(n, block_n):
    """Largest divisor of n that is <= block_n, preferring >= 2 grid steps."""
    cap = max(1, min(block_n, n))
    if n >= 2:
        cap = max(1, min(cap, n // 2))   # keep >=2 grid steps (v7x: 2 TCs)
    for b in range(cap, 0, -1):
        if n % b == 0:
            return b
    return 1


def random_shifts_aug(x, shifts, pad, *, block_n=8):
    """x: (N, C, H, W); shifts: (N, 2) int32 in [0, 2*pad] as (sx, sy)."""
    n, c, h, w = x.shape
    assert h == w
    assert pad < h

    b_blk = _pick_block(n, block_n)
    grid = (n // b_blk,)

    # Flat int32 shifts for SMEM prefetch: [sx0, sy0, sx1, sy1, ...]
    # (1-D layout avoids the 2-D SMEM padding blowup of an (N, 2) array.)
    flat_shifts = shifts.astype(jnp.int32).reshape(-1)

    nbytes = x.size * x.dtype.itemsize
    kernel = functools.partial(_random_shift_kernel, pad=pad, b_blk=b_blk)
    out = pl.pallas_call(
        kernel,
        out_shape=jax.ShapeDtypeStruct((n, c, h, w), x.dtype),
        grid_spec=pltpu.PrefetchScalarGridSpec(
            num_scalar_prefetch=1,
            grid=grid,
            in_specs=[
                pl.BlockSpec((b_blk, c, h, w), lambda g, s: (g, 0, 0, 0)),
            ],
            out_specs=pl.BlockSpec((b_blk, c, h, w), lambda g, s: (g, 0, 0, 0)),
            scratch_shapes=[pltpu.VMEM((c, h, w), x.dtype)],
        ),
        compiler_params=pltpu.CompilerParams(
            dimension_semantics=("parallel",)),
        cost_estimate=pl.CostEstimate(
            flops=0, transcendentals=0, bytes_accessed=2 * nbytes),
    )(flat_shifts, x)
    return out


def random_shifts_aug_forward(key, x, pad, *, block_n=8):
    """Matches the nn.Module interface: draws the random shifts internally."""
    n = x.shape[0]
    shifts = jax.random.randint(key, (n, 2), 0, 2 * pad + 1, dtype=jnp.int32)
    return random_shifts_aug(x, shifts, pad, block_n=block_n)


def _reference(x, shifts, pad):
    # Pure-JAX reference: replicate pad + per-sample integer crop.
    n, c, h, w = x.shape
    xp = jnp.pad(x, ((0, 0), (0, 0), (pad, pad), (pad, pad)), mode="edge")
    out = []
    for b in range(n):
        sx = int(shifts[b, 0])
        sy = int(shifts[b, 1])
        out.append(xp[b, :, sy:sy + h, sx:sx + w])
    return jnp.stack(out)


if __name__ == "__main__":
    key = jax.random.PRNGKey(0)
    kx, kx2, ks2, kx3, ks3 = jax.random.split(key, 5)

    # Case 1: small NCHW batch, pad=3, extreme corner shifts (exercise all edges).
    n, c, h, w = 2, 4, 16, 16
    pad = 3
    x = jax.random.normal(kx, (n, c, h, w), dtype=jnp.float32)
    shifts = jnp.array([[0, 2 * pad], [2 * pad, 0]], dtype=jnp.int32)

    out = jax.block_until_ready(random_shifts_aug(x, shifts, pad))
    ref = _reference(x, shifts, pad)
    assert out.shape == x.shape and out.dtype == x.dtype
    assert jnp.allclose(out, ref, atol=1e-6), "kernel mismatch vs reference (case 1)"

    # Case 2: multi-sample block (b_blk > 1) with random shifts.
    n2, c2, h2, w2 = 4, 2, 8, 8
    pad2 = 1
    x2 = jax.random.normal(kx2, (n2, c2, h2, w2), dtype=jnp.float32)
    shifts2 = jax.random.randint(ks2, (n2, 2), 0, 2 * pad2 + 1, dtype=jnp.int32)

    out2 = jax.block_until_ready(random_shifts_aug(x2, shifts2, pad2, block_n=4))
    ref2 = _reference(x2, shifts2, pad2)
    assert out2.shape == x2.shape and out2.dtype == x2.dtype
    assert jnp.allclose(out2, ref2, atol=1e-6), "kernel mismatch vs reference (case 2)"

    # Case 3: batch not divisible by block_n (falls back to a divisor, no padding).
    n3, c3, h3, w3 = 3, 2, 8, 8
    pad3 = 2
    x3 = jax.random.normal(kx3, (n3, c3, h3, w3), dtype=jnp.float32)
    shifts3 = jax.random.randint(ks3, (n3, 2), 0, 2 * pad3 + 1, dtype=jnp.int32)

    out3 = jax.block_until_ready(random_shifts_aug(x3, shifts3, pad3, block_n=8))
    ref3 = _reference(x3, shifts3, pad3)
    assert out3.shape == x3.shape and out3.dtype == x3.dtype
    assert jnp.allclose(out3, ref3, atol=1e-6), "kernel mismatch vs reference (case 3)"

    # Module-style forward (internal RNG), just check it runs and has right shape.
    out4 = jax.block_until_ready(random_shifts_aug_forward(kx, x, pad))
    assert out4.shape == x.shape and out4.dtype == x.dtype

    print("KERNEL_OK")
</pallas_src>

<mosaic_0001>
module attributes {stable_mosaic.version = 11 : i64} {
  func.func @_random_shift_kernel(%arg0: i32, %arg1: memref<4xi32, #tpu.memory_space<smem>>, %arg2: memref<1x4x16x16xf32, #tpu.memory_space<vmem>>, %arg3: memref<1x4x16x16xf32, #tpu.memory_space<vmem>>, %arg4: memref<4x16x16xf32, #tpu.memory_space<vmem>>) attributes {dimension_semantics = [#tpu.dimension_semantics<parallel>], iteration_bounds = array<i64: 2>, scalar_prefetch = 1 : i64, scratch_operands = 1 : i64, tpu.core_type = #tpu.core_type<tc>, window_params = [{transform_indices = @transform_0, window_bounds = array<i64: 1, 4, 16, 16>}, {transform_indices = @transform_1, window_bounds = array<i64: 1, 4, 16, 16>}]} {
    %c1_i32 = arith.constant 1 : i32
    %0 = arith.muli %arg0, %c1_i32 : i32
    %c0_i32 = arith.constant 0 : i32
    %1 = arith.addi %0, %c0_i32 : i32
    %c2_i32 = arith.constant 2 : i32
    %2 = arith.muli %c2_i32, %1 : i32
    %3 = arith.index_cast %2 : i32 to index
    %4 = memref.load %arg1[%3] : memref<4xi32, #tpu.memory_space<smem>>
    %c0_i32_0 = arith.constant 0 : i32
    %c6_i32 = arith.constant 6 : i32
    %5 = arith.maxsi %c0_i32_0, %4 : i32
    %6 = arith.minsi %c6_i32, %5 : i32
    %c2_i32_1 = arith.constant 2 : i32
    %7 = arith.muli %c2_i32_1, %1 : i32
    %c1_i32_2 = arith.constant 1 : i32
    %8 = arith.addi %7, %c1_i32_2 : i32
    %9 = arith.index_cast %8 : i32 to index
    %10 = memref.load %arg1[%9] : memref<4xi32, #tpu.memory_space<smem>>
    %c0_i32_3 = arith.constant 0 : i32
    %c6_i32_4 = arith.constant 6 : i32
    %11 = arith.maxsi %c0_i32_3, %10 : i32
    %12 = arith.minsi %c6_i32_4, %11 : i32
    %c0_i32_5 = arith.constant 0 : i32
    %13 = arith.cmpi eq, %12, %c0_i32_5 : i32
    %14 = arith.extui %13 : i1 to i32
    %c0_i32_6 = arith.constant 0 : i32
    %15 = arith.cmpi ne, %14, %c0_i32_6 : i32
    scf.if %15 {
      %c0 = arith.constant 0 : index
      %c0_30 = arith.constant 0 : index
      %c0_31 = arith.constant 0 : index
      %c0_32 = arith.constant 0 : index
      %55 = vector.load %arg2[%c0, %c0_30, %c0_31, %c0_32] : memref<1x4x16x16xf32, #tpu.memory_space<vmem>>, vector<1x4x13x16xf32>
      %56 = vector.shape_cast %55 : vector<1x4x13x16xf32> to vector<4x13x16xf32>
      %c0_33 = arith.constant 0 : index
      %c3 = arith.constant 3 : index
      %c0_34 = arith.constant 0 : index
      %57 = vector.load %arg4[%c0_33, %c3, %c0_34] : memref<4x16x16xf32, #tpu.memory_space<vmem>>, vector<4x13x16xf32>
      tpu.vector_store %arg4[%c0_33, %c3, %c0_34], %56 {strides = array<i32>} : memref<4x16x16xf32, #tpu.memory_space<vmem>>, vector<4x13x16xf32>,
      %c0_35 = arith.constant 0 : index
      %c0_36 = arith.constant 0 : index
      %c0_37 = arith.constant 0 : index
      %c0_38 = arith.constant 0 : index
      %58 = vector.load %arg2[%c0_35, %c0_36, %c0_37, %c0_38] : memref<1x4x16x16xf32, #tpu.memory_space<vmem>>, vector<1x4x1x16xf32>
      %59 = vector.shape_cast %58 : vector<1x4x1x16xf32> to vector<4x1x16xf32>
      %60 = vector.shape_cast %59 : vector<4x1x16xf32> to vector<4x1x16xf32>
      %61 = vector.broadcast %60 : vector<4x1x16xf32> to vector<4x3x16xf32>
      %c0_39 = arith.constant 0 : index
      %c0_40 = arith.constant 0 : index
      %c0_41 = arith.constant 0 : index
      %62 = vector.load %arg4[%c0_39, %c0_40, %c0_41] : memref<4x16x16xf32, #tpu.memory_space<vmem>>, vector<4x3x16xf32>
      tpu.vector_store %arg4[%c0_39, %c0_40, %c0_41], %61 {strides = array<i32>} : memref<4x16x16xf32, #tpu.memory_space<vmem>>, vector<4x3x16xf32>,
    } else {
    }
    %c1_i32_7 = arith.constant 1 : i32
    %16 = arith.cmpi eq, %12, %c1_i32_7 : i32
    %17 = arith.extui %16 : i1 to i32
    %c0_i32_8 = arith.constant 0 : i32
    %18 = arith.cmpi ne, %17, %c0_i32_8 : i32
    scf.if %18 {
      %c0 = arith.constant 0 : index
      %c0_30 = arith.constant 0 : index
      %c0_31 = arith.constant 0 : index
      %c0_32 = arith.constant 0 : index
      %55 = vector.load %arg2[%c0, %c0_30, %c0_31, %c0_32] : memref<1x4x16x16xf32, #tpu.memory_space<vmem>>, vector<1x4x14x16xf32>
      %56 = vector.shape_cast %55 : vector<1x4x14x16xf32> to vector<4x14x16xf32>
      %c0_33 = arith.constant 0 : index
      %c2 = arith.constant 2 : index
      %c0_34 = arith.constant 0 : index
      %57 = vector.load %arg4[%c0_33, %c2, %c0_34] : memref<4x16x16xf32, #tpu.memory_space<vmem>>, vector<4x14x16xf32>
      tpu.vector_store %arg4[%c0_33, %c2, %c0_34], %56 {strides = array<i32>} : memref<4x16x16xf32, #tpu.memory_space<vmem>>, vector<4x14x16xf32>,
      %c0_35 = arith.constant 0 : index
      %c0_36 = arith.constant 0 : index
      %c0_37 = arith.constant 0 : index
      %c0_38 = arith.constant 0 : index
      %58 = vector.load %arg2[%c0_35, %c0_36, %c0_37, %c0_38] : memref<1x4x16x16xf32, #tpu.memory_space<vmem>>, vector<1x4x1x16xf32>
      %59 = vector.shape_cast %58 : vector<1x4x1x16xf32> to vector<4x1x16xf32>
      %60 = vector.shape_cast %59 : vector<4x1x16xf32> to vector<4x1x16xf32>
      %61 = vector.broadcast %60 : vector<4x1x16xf32> to vector<4x2x16xf32>
      %c0_39 = arith.constant 0 : index
      %c0_40 = arith.constant 0 : index
      %c0_41 = arith.constant 0 : index
      %62 = vector.load %arg4[%c0_39, %c0_40, %c0_41] : memref<4x16x16xf32, #tpu.memory_space<vmem>>, vector<4x2x16xf32>
      tpu.vector_store %arg4[%c0_39, %c0_40, %c0_41], %61 {strides = array<i32>} : memref<4x16x16xf32, #tpu.memory_space<vmem>>, vector<4x2x16xf32>,
    } else {
    }
    %c2_i32_9 = arith.constant 2 : i32
    %19 = arith.cmpi eq, %12, %c2_i32_9 : i32
    %20 = arith.extui %19 : i1 to i32
    %c0_i32_10 = arith.constant 0 : i32
    %21 = arith.cmpi ne, %20, %c0_i32_10 : i32
    scf.if %21 {
      %c0 = arith.constant 0 : index
      %c0_30 = arith.constant 0 : index
      %c0_31 = arith.constant 0 : index
      %c0_32 = arith.constant 0 : index
      %55 = vector.load %arg2[%c0, %c0_30, %c0_31, %c0_32] : memref<1x4x16x16xf32, #tpu.memory_space<vmem>>, vector<1x4x15x16xf32>
      %56 = vector.shape_cast %55 : vector<1x4x15x16xf32> to vector<4x15x16xf32>
      %c0_33 = arith.constant 0 : index
      %c1 = arith.constant 1 : index
      %c0_34 = arith.constant 0 : index
      %57 = vector.load %arg4[%c0_33, %c1, %c0_34] : memref<4x16x16xf32, #tpu.memory_space<vmem>>, vector<4x15x16xf32>
      tpu.vector_store %arg4[%c0_33, %c1, %c0_34], %56 {strides = array<i32>} : memref<4x16x16xf32, #tpu.memory_space<vmem>>, vector<4x15x16xf32>,
      %c0_35 = arith.constant 0 : index
      %c0_36 = arith.constant 0 : index
      %c0_37 = arith.constant 0 : index
      %c0_38 = arith.constant 0 : index
      %58 = vector.load %arg2[%c0_35, %c0_36, %c0_37, %c0_38] : memref<1x4x16x16xf32, #tpu.memory_space<vmem>>, vector<1x4x1x16xf32>
      %59 = vector.shape_cast %58 : vector<1x4x1x16xf32> to vector<4x1x16xf32>
      %c0_39 = arith.constant 0 : index
      %c0_40 = arith.constant 0 : index
      %c0_41 = arith.constant 0 : index
      %60 = vector.load %arg4[%c0_39, %c0_40, %c0_41] : memref<4x16x16xf32, #tpu.memory_space<vmem>>, vector<4x1x16xf32>
      tpu.vector_store %arg4[%c0_39, %c0_40, %c0_41], %59 {strides = array<i32>} : memref<4x16x16xf32, #tpu.memory_space<vmem>>, vector<4x1x16xf32>,
    } else {
    }
    %c3_i32 = arith.constant 3 : i32
    %22 = arith.cmpi eq, %12, %c3_i32 : i32
    %23 = arith.extui %22 : i1 to i32
    %c0_i32_11 = arith.constant 0 : i32
    %24 = arith.cmpi ne, %23, %c0_i32_11 : i32
    scf.if %24 {
      %c0 = arith.constant 0 : index
      %c0_30 = arith.constant 0 : index
      %c0_31 = arith.constant 0 : index
      %c0_32 = arith.constant 0 : index
      %55 = vector.load %arg2[%c0, %c0_30, %c0_31, %c0_32] : memref<1x4x16x16xf32, #tpu.memory_space<vmem>>, vector<1x4x16x16xf32>
      %56 = vector.shape_cast %55 : vector<1x4x16x16xf32> to vector<4x16x16xf32>
      %c0_33 = arith.constant 0 : index
      %c0_34 = arith.constant 0 : index
      %c0_35 = arith.constant 0 : index
      %57 = vector.load %arg4[%c0_33, %c0_34, %c0_35] : memref<4x16x16xf32, #tpu.memory_space<vmem>>, vector<4x16x16xf32>
      tpu.vector_store %arg4[%c0_33, %c0_34, %c0_35], %56 {strides = array<i32>} : memref<4x16x16xf32, #tpu.memory_space<vmem>>, vector<4x16x16xf32>,
    } else {
    }
    %c4_i32 = arith.constant 4 : i32
    %25 = arith.cmpi eq, %12, %c4_i32 : i32
    %26 = arith.extui %25 : i1 to i32
    %c0_i32_12 = arith.constant 0 : i32
    %27 = arith.cmpi ne, %26, %c0_i32_12 : i32
    scf.if %27 {
      %c0 = arith.constant 0 : index
      %c0_30 = arith.constant 0 : index
      %c1 = arith.constant 1 : index
      %c0_31 = arith.constant 0 : index
      %55 = vector.load %arg2[%c0, %c0_30, %c1, %c0_31] : memref<1x4x16x16xf32, #tpu.memory_space<vmem>>, vector<1x4x15x16xf32>
      %56 = vector.shape_cast %55 : vector<1x4x15x16xf32> to vector<4x15x16xf32>
      %c0_32 = arith.constant 0 : index
      %c0_33 = arith.constant 0 : index
      %c0_34 = arith.constant 0 : index
      %57 = vector.load %arg4[%c0_32, %c0_33, %c0_34] : memref<4x16x16xf32, #tpu.memory_space<vmem>>, vector<4x15x16xf32>
      tpu.vector_store %arg4[%c0_32, %c0_33, %c0_34], %56 {strides = array<i32>} : memref<4x16x16xf32, #tpu.memory_space<vmem>>, vector<4x15x16xf32>,
      %c0_35 = arith.constant 0 : index
      %c0_36 = arith.constant 0 : index
      %c15 = arith.constant 15 : index
      %c0_37 = arith.constant 0 : index
      %58 = vector.load %arg2[%c0_35, %c0_36, %c15, %c0_37] : memref<1x4x16x16xf32, #tpu.memory_space<vmem>>, vector<1x4x1x16xf32>
      %59 = vector.shape_cast %58 : vector<1x4x1x16xf32> to vector<4x1x16xf32>
      %c0_38 = arith.constant 0 : index
      %c15_39 = arith.constant 15 : index
      %c0_40 = arith.constant 0 : index
      %60 = vector.load %arg4[%c0_38, %c15_39, %c0_40] : memref<4x16x16xf32, #tpu.memory_space<vmem>>, vector<4x1x16xf32>
      tpu.vector_store %arg4[%c0_38, %c15_39, %c0_40], %59 {strides = array<i32>} : memref<4x16x16xf32, #tpu.memory_space<vmem>>, vector<4x1x16xf32>,
    } else {
    }
    %c5_i32 = arith.constant 5 : i32
    %28 = arith.cmpi eq, %12, %c5_i32 : i32
    %29 = arith.extui %28 : i1 to i32
    %c0_i32_13 = arith.constant 0 : i32
    %30 = arith.cmpi ne, %29, %c0_i32_13 : i32
    scf.if %30 {
      %c0 = arith.constant 0 : index
      %c0_30 = arith.constant 0 : index
      %c2 = arith.constant 2 : index
      %c0_31 = arith.constant 0 : index
      %55 = vector.load %arg2[%c0, %c0_30, %c2, %c0_31] : memref<1x4x16x16xf32, #tpu.memory_space<vmem>>, vector<1x4x14x16xf32>
      %56 = vector.shape_cast %55 : vector<1x4x14x16xf32> to vector<4x14x16xf32>
      %c0_32 = arith.constant 0 : index
      %c0_33 = arith.constant 0 : index
      %c0_34 = arith.constant 0 : index
      %57 = vector.load %arg4[%c0_32, %c0_33, %c0_34] : memref<4x16x16xf32, #tpu.memory_space<vmem>>, vector<4x14x16xf32>
      tpu.vector_store %arg4[%c0_32, %c0_33, %c0_34], %56 {strides = array<i32>} : memref<4x16x16xf32, #tpu.memory_space<vmem>>, vector<4x14x16xf32>,
      %c0_35 = arith.constant 0 : index
      %c0_36 = arith.constant 0 : index
      %c15 = arith.constant 15 : index
      %c0_37 = arith.constant 0 : index
      %58 = vector.load %arg2[%c0_35, %c0_36, %c15, %c0_37] : memref<1x4x16x16xf32, #tpu.memory_space<vmem>>, vector<1x4x1x16xf32>
      %59 = vector.shape_cast %58 : vector<1x4x1x16xf32> to vector<4x1x16xf32>
      %60 = vector.shape_cast %59 : vector<4x1x16xf32> to vector<4x1x16xf32>
      %61 = vector.broadcast %60 : vector<4x1x16xf32> to vector<4x2x16xf32>
      %c0_38 = arith.constant 0 : index
      %c14 = arith.constant 14 : index
      %c0_39 = arith.constant 0 : index
      %62 = vector.load %arg4[%c0_38, %c14, %c0_39] : memref<4x16x16xf32, #tpu.memory_space<vmem>>, vector<4x2x16xf32>
      tpu.vector_store %arg4[%c0_38, %c14, %c0_39], %61 {strides = array<i32>} : memref<4x16x16xf32, #tpu.memory_space<vmem>>, vector<4x2x16xf32>,
    } else {
    }
    %c6_i32_14 = arith.constant 6 : i32
    %31 = arith.cmpi eq, %12, %c6_i32_14 : i32
    %32 = arith.extui %31 : i1 to i32
    %c0_i32_15 = arith.constant 0 : i32
    %33 = arith.cmpi ne, %32, %c0_i32_15 : i32
    scf.if %33 {
      %c0 = arith.constant 0 : index
      %c0_30 = arith.constant 0 : index
      %c3 = arith.constant 3 : index
      %c0_31 = arith.constant 0 : index
      %55 = vector.load %arg2[%c0, %c0_30, %c3, %c0_31] : memref<1x4x16x16xf32, #tpu.memory_space<vmem>>, vector<1x4x13x16xf32>
      %56 = vector.shape_cast %55 : vector<1x4x13x16xf32> to vector<4x13x16xf32>
      %c0_32 = arith.constant 0 : index
      %c0_33 = arith.constant 0 : index
      %c0_34 = arith.constant 0 : index
      %57 = vector.load %arg4[%c0_32, %c0_33, %c0_34] : memref<4x16x16xf32, #tpu.memory_space<vmem>>, vector<4x13x16xf32>
      tpu.vector_store %arg4[%c0_32, %c0_33, %c0_34], %56 {strides = array<i32>} : memref<4x16x16xf32, #tpu.memory_space<vmem>>, vector<4x13x16xf32>,
      %c0_35 = arith.constant 0 : index
      %c0_36 = arith.constant 0 : index
      %c15 = arith.constant 15 : index
      %c0_37 = arith.constant 0 : index
      %58 = vector.load %arg2[%c0_35, %c0_36, %c15, %c0_37] : memref<1x4x16x16xf32, #tpu.memory_space<vmem>>, vector<1x4x1x16xf32>
      %59 = vector.shape_cast %58 : vector<1x4x1x16xf32> to vector<4x1x16xf32>
      %60 = vector.shape_cast %59 : vector<4x1x16xf32> to vector<4x1x16xf32>
      %61 = vector.broadcast %60 : vector<4x1x16xf32> to vector<4x3x16xf32>
      %c0_38 = arith.constant 0 : index
      %c13 = arith.constant 13 : index
      %c0_39 = arith.constant 0 : index
      %62 = vector.load %arg4[%c0_38, %c13, %c0_39] : memref<4x16x16xf32, #tpu.memory_space<vmem>>, vector<4x3x16xf32>
      tpu.vector_store %arg4[%c0_38, %c13, %c0_39], %61 {strides = array<i32>} : memref<4x16x16xf32, #tpu.memory_space<vmem>>, vector<4x3x16xf32>,
    } else {
    }
    %c0_i32_16 = arith.constant 0 : i32
    %34 = arith.cmpi eq, %6, %c0_i32_16 : i32
    %35 = arith.extui %34 : i1 to i32
    %c0_i32_17 = arith.constant 0 : i32
    %36 = arith.cmpi ne, %35, %c0_i32_17 : i32
    scf.if %36 {
      %c0 = arith.constant 0 : index
      %c0_30 = arith.constant 0 : index
      %c0_31 = arith.constant 0 : index
      %55 = vector.load %arg4[%c0, %c0_30, %c0_31] : memref<4x16x16xf32, #tpu.memory_space<vmem>>, vector<4x16x13xf32>
      %c0_32 = arith.constant 0 : index
      %c0_33 = arith.constant 0 : index
      %c0_34 = arith.constant 0 : index
      %c3 = arith.constant 3 : index
      %56 = vector.load %arg3[%c0_32, %c0_33, %c0_34, %c3] : memref<1x4x16x16xf32, #tpu.memory_space<vmem>>, vector<1x4x16x13xf32>
      %57 = vector.shape_cast %56 : vector<1x4x16x13xf32> to vector<4x16x13xf32>
      %58 = vector.shape_cast %55 : vector<4x16x13xf32> to vector<1x4x16x13xf32>
      tpu.vector_store %arg3[%c0_32, %c0_33, %c0_34, %c3], %58 {strides = array<i32>} : memref<1x4x16x16xf32, #tpu.memory_space<vmem>>, vector<1x4x16x13xf32>,
      %c0_35 = arith.constant 0 : index
      %c0_36 = arith.constant 0 : index
      %c0_37 = arith.constant 0 : index
      %59 = vector.load %arg4[%c0_35, %c0_36, %c0_37] : memref<4x16x16xf32, #tpu.memory_space<vmem>>, vector<4x16x1xf32>
      %60 = vector.shape_cast %59 : vector<4x16x1xf32> to vector<4x16x1xf32>
      %61 = vector.broadcast %60 : vector<4x16x1xf32> to vector<4x16x3xf32>
      %c0_38 = arith.constant 0 : index
      %c0_39 = arith.constant 0 : index
      %c0_40 = arith.constant 0 : index
      %c0_41 = arith.constant 0 : index
      %62 = vector.load %arg3[%c0_38, %c0_39, %c0_40, %c0_41] : memref<1x4x16x16xf32, #tpu.memory_space<vmem>>, vector<1x4x16x3xf32>
      %63 = vector.shape_cast %62 : vector<1x4x16x3xf32> to vector<4x16x3xf32>
      %64 = vector.shape_cast %61 : vector<4x16x3xf32> to vector<1x4x16x3xf32>
      tpu.vector_store %arg3[%c0_38, %c0_39, %c0_40, %c0_41], %64 {strides = array<i32>} : memref<1x4x16x16xf32, #tpu.memory_space<vmem>>, vector<1x4x16x3xf32>,
    } else {
    }
    %c1_i32_18 = arith.constant 1 : i32
    %37 = arith.cmpi eq, %6, %c1_i32_18 : i32
    %38 = arith.extui %37 : i1 to i32
    %c0_i32_19 = arith.constant 0 : i32
    %39 = arith.cmpi ne, %38, %c0_i32_19 : i32
    scf.if %39 {
      %c0 = arith.constant 0 : index
      %c0_30 = arith.constant 0 : index
      %c0_31 = arith.constant 0 : index
      %55 = vector.load %arg4[%c0, %c0_30, %c0_31] : memref<4x16x16xf32, #tpu.memory_space<vmem>>, vector<4x16x14xf32>
      %c0_32 = arith.constant 0 : index
      %c0_33 = arith.constant 0 : index
      %c0_34 = arith.constant 0 : index
      %c2 = arith.constant 2 : index
      %56 = vector.load %arg3[%c0_32, %c0_33, %c0_34, %c2] : memref<1x4x16x16xf32, #tpu.memory_space<vmem>>, vector<1x4x16x14xf32>
      %57 = vector.shape_cast %56 : vector<1x4x16x14xf32> to vector<4x16x14xf32>
      %58 = vector.shape_cast %55 : vector<4x16x14xf32> to vector<1x4x16x14xf32>
      tpu.vector_store %arg3[%c0_32, %c0_33, %c0_34, %c2], %58 {strides = array<i32>} : memref<1x4x16x16xf32, #tpu.memory_space<vmem>>, vector<1x4x16x14xf32>,
      %c0_35 = arith.constant 0 : index
      %c0_36 = arith.constant 0 : index
      %c0_37 = arith.constant 0 : index
      %59 = vector.load %arg4[%c0_35, %c0_36, %c0_37] : memref<4x16x16xf32, #tpu.memory_space<vmem>>, vector<4x16x1xf32>
      %60 = vector.shape_cast %59 : vector<4x16x1xf32> to vector<4x16x1xf32>
      %61 = vector.broadcast %60 : vector<4x16x1xf32> to vector<4x16x2xf32>
      %c0_38 = arith.constant 0 : index
      %c0_39 = arith.constant 0 : index
      %c0_40 = arith.constant 0 : index
      %c0_41 = arith.constant 0 : index
      %62 = vector.load %arg3[%c0_38, %c0_39, %c0_40, %c0_41] : memref<1x4x16x16xf32, #tpu.memory_space<vmem>>, vector<1x4x16x2xf32>
      %63 = vector.shape_cast %62 : vector<1x4x16x2xf32> to vector<4x16x2xf32>
      %64 = vector.shape_cast %61 : vector<4x16x2xf32> to vector<1x4x16x2xf32>
      tpu.vector_store %arg3[%c0_38, %c0_39, %c0_40, %c0_41], %64 {strides = array<i32>} : memref<1x4x16x16xf32, #tpu.memory_space<vmem>>, vector<1x4x16x2xf32>,
    } else {
    }
    %c2_i32_20 = arith.constant 2 : i32
    %40 = arith.cmpi eq, %6, %c2_i32_20 : i32
    %41 = arith.extui %40 : i1 to i32
    %c0_i32_21 = arith.constant 0 : i32
    %42 = arith.cmpi ne, %41, %c0_i32_21 : i32
    scf.if %42 {
      %c0 = arith.constant 0 : index
      %c0_30 = arith.constant 0 : index
      %c0_31 = arith.constant 0 : index
      %55 = vector.load %arg4[%c0, %c0_30, %c0_31] : memref<4x16x16xf32, #tpu.memory_space<vmem>>, vector<4x16x15xf32>
      %c0_32 = arith.constant 0 : index
      %c0_33 = arith.constant 0 : index
      %c0_34 = arith.constant 0 : index
      %c1 = arith.constant 1 : index
      %56 = vector.load %arg3[%c0_32, %c0_33, %c0_34, %c1] : memref<1x4x16x16xf32, #tpu.memory_space<vmem>>, vector<1x4x16x15xf32>
      %57 = vector.shape_cast %56 : vector<1x4x16x15xf32> to vector<4x16x15xf32>
      %58 = vector.shape_cast %55 : vector<4x16x15xf32> to vector<1x4x16x15xf32>
      tpu.vector_store %arg3[%c0_32, %c0_33, %c0_34, %c1], %58 {strides = array<i32>} : memref<1x4x16x16xf32, #tpu.memory_space<vmem>>, vector<1x4x16x15xf32>,
      %c0_35 = arith.constant 0 : index
      %c0_36 = arith.constant 0 : index
      %c0_37 = arith.constant 0 : index
      %59 = vector.load %arg4[%c0_35, %c0_36, %c0_37] : memref<4x16x16xf32, #tpu.memory_space<vmem>>, vector<4x16x1xf32>
      %c0_38 = arith.constant 0 : index
      %c0_39 = arith.constant 0 : index
      %c0_40 = arith.constant 0 : index
      %c0_41 = arith.constant 0 : index
      %60 = vector.load %arg3[%c0_38, %c0_39, %c0_40, %c0_41] : memref<1x4x16x16xf32, #tpu.memory_space<vmem>>, vector<1x4x16x1xf32>
      %61 = vector.shape_cast %60 : vector<1x4x16x1xf32> to vector<4x16x1xf32>
      %62 = vector.shape_cast %59 : vector<4x16x1xf32> to vector<1x4x16x1xf32>
      tpu.vector_store %arg3[%c0_38, %c0_39, %c0_40, %c0_41], %62 {strides = array<i32>} : memref<1x4x16x16xf32, #tpu.memory_space<vmem>>, vector<1x4x16x1xf32>,
    } else {
    }
    %c3_i32_22 = arith.constant 3 : i32
    %43 = arith.cmpi eq, %6, %c3_i32_22 : i32
    %44 = arith.extui %43 : i1 to i32
    %c0_i32_23 = arith.constant 0 : i32
    %45 = arith.cmpi ne, %44, %c0_i32_23 : i32
    scf.if %45 {
      %c0 = arith.constant 0 : index
      %c0_30 = arith.constant 0 : index
      %c0_31 = arith.constant 0 : index
      %55 = vector.load %arg4[%c0, %c0_30, %c0_31] : memref<4x16x16xf32, #tpu.memory_space<vmem>>, vector<4x16x16xf32>
      %c0_32 = arith.constant 0 : index
      %c0_33 = arith.constant 0 : index
      %c0_34 = arith.constant 0 : index
      %c0_35 = arith.constant 0 : index
      %56 = vector.load %arg3[%c0_32, %c0_33, %c0_34, %c0_35] : memref<1x4x16x16xf32, #tpu.memory_space<vmem>>, vector<1x4x16x16xf32>
      %57 = vector.shape_cast %56 : vector<1x4x16x16xf32> to vector<4x16x16xf32>
      %58 = vector.shape_cast %55 : vector<4x16x16xf32> to vector<1x4x16x16xf32>
      tpu.vector_store %arg3[%c0_32, %c0_33, %c0_34, %c0_35], %58 {strides = array<i32>} : memref<1x4x16x16xf32, #tpu.memory_space<vmem>>, vector<1x4x16x16xf32>,
    } else {
    }
    %c4_i32_24 = arith.constant 4 : i32
    %46 = arith.cmpi eq, %6, %c4_i32_24 : i32
    %47 = arith.extui %46 : i1 to i32
    %c0_i32_25 = arith.constant 0 : i32
    %48 = arith.cmpi ne, %47, %c0_i32_25 : i32
    scf.if %48 {
      %c0 = arith.constant 0 : index
      %c0_30 = arith.constant 0 : index
      %c1 = arith.constant 1 : index
      %55 = vector.load %arg4[%c0, %c0_30, %c1] : memref<4x16x16xf32, #tpu.memory_space<vmem>>, vector<4x16x15xf32>
      %c0_31 = arith.constant 0 : index
      %c0_32 = arith.constant 0 : index
      %c0_33 = arith.constant 0 : index
      %c0_34 = arith.constant 0 : index
      %56 = vector.load %arg3[%c0_31, %c0_32, %c0_33, %c0_34] : memref<1x4x16x16xf32, #tpu.memory_space<vmem>>, vector<1x4x16x15xf32>
      %57 = vector.shape_cast %56 : vector<1x4x16x15xf32> to vector<4x16x15xf32>
      %58 = vector.shape_cast %55 : vector<4x16x15xf32> to vector<1x4x16x15xf32>
      tpu.vector_store %arg3[%c0_31, %c0_32, %c0_33, %c0_34], %58 {strides = array<i32>} : memref<1x4x16x16xf32, #tpu.memory_space<vmem>>, vector<1x4x16x15xf32>,
      %c0_35 = arith.constant 0 : index
      %c0_36 = arith.constant 0 : index
      %c15 = arith.constant 15 : index
      %59 = vector.load %arg4[%c0_35, %c0_36, %c15] : memref<4x16x16xf32, #tpu.memory_space<vmem>>, vector<4x16x1xf32>
      %c0_37 = arith.constant 0 : index
      %c0_38 = arith.constant 0 : index
      %c0_39 = arith.constant 0 : index
      %c15_40 = arith.constant 15 : index
      %60 = vector.load %arg3[%c0_37, %c0_38, %c0_39, %c15_40] : memref<1x4x16x16xf32, #tpu.memory_space<vmem>>, vector<1x4x16x1xf32>
      %61 = vector.shape_cast %60 : vector<1x4x16x1xf32> to vector<4x16x1xf32>
      %62 = vector.shape_cast %59 : vector<4x16x1xf32> to vector<1x4x16x1xf32>
      tpu.vector_store %arg3[%c0_37, %c0_38, %c0_39, %c15_40], %62 {strides = array<i32>} : memref<1x4x16x16xf32, #tpu.memory_space<vmem>>, vector<1x4x16x1xf32>,
    } else {
    }
    %c5_i32_26 = arith.constant 5 : i32
    %49 = arith.cmpi eq, %6, %c5_i32_26 : i32
    %50 = arith.extui %49 : i1 to i32
    %c0_i32_27 = arith.constant 0 : i32
    %51 = arith.cmpi ne, %50, %c0_i32_27 : i32
    scf.if %51 {
      %c0 = arith.constant 0 : index
      %c0_30 = arith.constant 0 : index
      %c2 = arith.constant 2 : index
      %55 = vector.load %arg4[%c0, %c0_30, %c2] : memref<4x16x16xf32, #tpu.memory_space<vmem>>, vector<4x16x14xf32>
      %c0_31 = arith.constant 0 : index
      %c0_32 = arith.constant 0 : index
      %c0_33 = arith.constant 0 : index
      %c0_34 = arith.constant 0 : index
      %56 = vector.load %arg3[%c0_31, %c0_32, %c0_33, %c0_34] : memref<1x4x16x16xf32, #tpu.memory_space<vmem>>, vector<1x4x16x14xf32>
      %57 = vector.shape_cast %56 : vector<1x4x16x14xf32> to vector<4x16x14xf32>
      %58 = vector.shape_cast %55 : vector<4x16x14xf32> to vector<1x4x16x14xf32>
      tpu.vector_store %arg3[%c0_31, %c0_32, %c0_33, %c0_34], %58 {strides = array<i32>} : memref<1x4x16x16xf32, #tpu.memory_space<vmem>>, vector<1x4x16x14xf32>,
      %c0_35 = arith.constant 0 : index
      %c0_36 = arith.constant 0 : index
      %c15 = arith.constant 15 : index
      %59 = vector.load %arg4[%c0_35, %c0_36, %c15] : memref<4x16x16xf32, #tpu.memory_space<vmem>>, vector<4x16x1xf32>
      %60 = vector.shape_cast %59 : vector<4x16x1xf32> to vector<4x16x1xf32>
      %61 = vector.broadcast %60 : vector<4x16x1xf32> to vector<4x16x2xf32>
      %c0_37 = arith.constant 0 : index
      %c0_38 = arith.constant 0 : index
      %c0_39 = arith.constant 0 : index
      %c14 = arith.constant 14 : index
      %62 = vector.load %arg3[%c0_37, %c0_38, %c0_39, %c14] : memref<1x4x16x16xf32, #tpu.memory_space<vmem>>, vector<1x4x16x2xf32>
      %63 = vector.shape_cast %62 : vector<1x4x16x2xf32> to vector<4x16x2xf32>
      %64 = vector.shape_cast %61 : vector<4x16x2xf32> to vector<1x4x16x2xf32>
      tpu.vector_store %arg3[%c0_37, %c0_38, %c0_39, %c14], %64 {strides = array<i32>} : memref<1x4x16x16xf32, #tpu.memory_space<vmem>>, vector<1x4x16x2xf32>,
    } else {
    }
    %c6_i32_28 = arith.constant 6 : i32
    %52 = arith.cmpi eq, %6, %c6_i32_28 : i32
    %53 = arith.extui %52 : i1 to i32
    %c0_i32_29 = arith.constant 0 : i32
    %54 = arith.cmpi ne, %53, %c0_i32_29 : i32
    scf.if %54 {
      %c0 = arith.constant 0 : index
      %c0_30 = arith.constant 0 : index
      %c3 = arith.constant 3 : index
      %55 = vector.load %arg4[%c0, %c0_30, %c3] : memref<4x16x16xf32, #tpu.memory_space<vmem>>, vector<4x16x13xf32>
      %c0_31 = arith.constant 0 : index
      %c0_32 = arith.constant 0 : index
      %c0_33 = arith.constant 0 : index
      %c0_34 = arith.constant 0 : index
      %56 = vector.load %arg3[%c0_31, %c0_32, %c0_33, %c0_34] : memref<1x4x16x16xf32, #tpu.memory_space<vmem>>, vector<1x4x16x13xf32>
      %57 = vector.shape_cast %56 : vector<1x4x16x13xf32> to vector<4x16x13xf32>
      %58 = vector.shape_cast %55 : vector<4x16x13xf32> to vector<1x4x16x13xf32>
      tpu.vector_store %arg3[%c0_31, %c0_32, %c0_33, %c0_34], %58 {strides = array<i32>} : memref<1x4x16x16xf32, #tpu.memory_space<vmem>>, vector<1x4x16x13xf32>,
      %c0_35 = arith.constant 0 : index
      %c0_36 = arith.constant 0 : index
      %c15 = arith.constant 15 : index
      %59 = vector.load %arg4[%c0_35, %c0_36, %c15] : memref<4x16x16xf32, #tpu.memory_space<vmem>>, vector<4x16x1xf32>
      %60 = vector.shape_cast %59 : vector<4x16x1xf32> to vector<4x16x1xf32>
      %61 = vector.broadcast %60 : vector<4x16x1xf32> to vector<4x16x3xf32>
      %c0_37 = arith.constant 0 : index
      %c0_38 = arith.constant 0 : index
      %c0_39 = arith.constant 0 : index
      %c13 = arith.constant 13 : index
      %62 = vector.load %arg3[%c0_37, %c0_38, %c0_39, %c13] : memref<1x4x16x16xf32, #tpu.memory_space<vmem>>, vector<1x4x16x3xf32>
      %63 = vector.shape_cast %62 : vector<1x4x16x3xf32> to vector<4x16x3xf32>
      %64 = vector.shape_cast %61 : vector<4x16x3xf32> to vector<1x4x16x3xf32>
      tpu.vector_store %arg3[%c0_37, %c0_38, %c0_39, %c13], %64 {strides = array<i32>} : memref<1x4x16x16xf32, #tpu.memory_space<vmem>>, vector<1x4x16x3xf32>,
    } else {
    }
    return
  }
  func.func @transform_0(%arg0: i32, %arg1: memref<4xi32, #tpu.memory_space<smem>>) -> (i32, i32, i32, i32) {
    %c0_i32 = arith.constant 0 : i32
    %c0_i32_0 = arith.constant 0 : i32
    %c0_i32_1 = arith.constant 0 : i32
    %c0_i32_2 = arith.constant 0 : i32
    return %arg0, %c0_i32, %c0_i32_0, %c0_i32_1 : i32, i32, i32, i32
  }
  func.func @transform_1(%arg0: i32, %arg1: memref<4xi32, #tpu.memory_space<smem>>) -> (i32, i32, i32, i32) {
    %c0_i32 = arith.constant 0 : i32
    %c0_i32_0 = arith.constant 0 : i32
    %c0_i32_1 = arith.constant 0 : i32
    %c0_i32_2 = arith.constant 0 : i32
    return %arg0, %c0_i32, %c0_i32_0, %c0_i32_1 : i32, i32, i32, i32
  }
}

</mosaic_0001>

<llo_original>
// kernel: tpu_custom_call.1
$region0: #{tpu_custom_call.1}
  #allocation0 [shape = 'u32[]', space=smem, size = 0x4, offset = 0x4, fixed_abs, tag = 'smem constant byte address 0x4 - core index']
  #allocation1 [shape = 'u32[144,128]{1,0:T(1,128)}', space=vmem, size = 0x12000, scoped, tag = 'internal scratch']
  #allocation2 [shape = 'f32[4,16,16]{2,1,0:T(8,128)}', space=vmem, size = 0x8000, scoped, tag = 'scratch operand']
  #allocation3 [shape = 's32[1]{0}', space=sflag, size = 0x4, scoped, tag = 'scoped memory for tpu_custom_call.1']
  #allocation4 [shape = 'u8[512]{0}', space=smem, size = 0x200, scoped, tag = 'prefetched SMEM operand 0']
  %s0 = inlined_call_operand.hbm [shape: s32[4], index: 0, kind: input, shape index: {}]
  %s1 = inlined_call_operand.hbm [shape: f32[2,4,16,16], index: 1, kind: input, shape index: {}]
  %s2 = inlined_call_operand.hbm [shape: f32[2,4,16,16], index: 2, kind: output, shape index: {}]
  %s3 = sld [smem:[#allocation0]]
  $region97: #{tpu_custom_call.1} parent=0
    _
  %s5 = ssub.s32 1, %s3
  %s6 = scalar_select 0, %s5, %s3
  %8 = dma.hbm_to_smem %s0, 16, [#allocation4], [#allocation3]
  %9 = dma.done [#allocation3], 16
  %10 = sfence
  $region1: #{tpu_custom_call.1} parent=0
    #allocation5 [shape = 'u8[65536]{0}', space=vmem, size = 0x10000, scoped, tag = 'input window, operand 1']
    #allocation6 [shape = 's32[2]{0}', space=sflag, size = 0x8, scoped, tag = 'scoped memory for tpu_custom_call.1']
    #allocation7 [shape = 's32[2]{0}', space=sflag, size = 0x8, scoped, tag = 'scoped memory for tpu_custom_call.1']
    #allocation8 [shape = 'u8[65536]{0}', space=vmem, size = 0x10000, scoped, tag = 'output window, operand 0']
    %11 = vsyncpa [#allocation6], 0
    %s12 = scalar_lea.sflag [#allocation6], 1
    %13 = vsyncpa %s12, 0
    %14 = vsyncpa [#allocation7], 0
    %s15 = scalar_lea.sflag [#allocation7], 1
    %16 = vsyncpa %s15, 0
    loop: start=0, step=1, limit=4
    $region2: #{tpu_custom_call.1} parent=1 // loop_pre_header
      _
    $region3: #{tpu_custom_call.1} parent=1 // loop_header
      %s18 = sphi 0, %s22
      %p19 = scmp.ge.s32.totalorder %s18, 4
      %s28 = sphi 0, %s30
      %s31 = sphi 0, %s28
      %s32 = sphi 0, %s31
      %s48 = sphi 0, %s32
      %s54 = sphi 0, %s56
      %s57 = sphi 0, %s54
      %s58 = sphi 0, %s57
      %s74 = sphi 0, %s58
    $region4: #{tpu_custom_call.1} parent=1 // loop_header_branch
      %21 = sbr.rel (%p19) target = $region8
    $region5: #{tpu_custom_call.1} parent=1 // loop_body
      %s23 = ssub.s32 %s18, 1
      %s24 = ssub.s32 %s18, 2
      %s25 = sadd.s32 %s18, 1
      %s26 = ssub.s32 %s18, %s25
      %p27 = scmp.eq.s32.totalorder %s26, 0
      %s29 = sadd.s32 %s28, 1
      %s30 = scalar_select %p27, %s28, %s29
      %p33 = pneg %p27
      %p34 = scmp.eq.s32.totalorder %s18, 1
      %p35 = por %p33, %p34
      %p36 = scmp.ne.s32.totalorder %s28, %s31
      %p37 = scmp.eq.s32.totalorder %s18, 0
      %p38 = por %p36, %p37
      %p39 = scmp.ne.s32.totalorder %s28, %s31
      %p40 = scmp.eq.s32.totalorder %s23, 1
      %p41 = por %p39, %p40
      %p42 = scmp.ne.s32.totalorder %s31, %s32
      %p43 = scmp.eq.s32.totalorder %s23, 0
      %p44 = por %p42, %p43
      %p45 = scmp.ne.s32.totalorder %s31, %s32
      %p46 = scmp.eq.s32.totalorder %s24, 1
      %p47 = por %p45, %p46
      %p49 = scmp.ne.s32.totalorder %s32, %s48
      %p50 = scmp.eq.s32.totalorder %s24, 0
      %p51 = por %p49, %p50
      %s52 = ssub.s32 %s18, %s25
      %p53 = scmp.eq.s32.totalorder %s52, 0
      %s55 = sadd.s32 %s54, 1
      %s56 = scalar_select %p53, %s54, %s55
      %p59 = pneg %p53
      %p60 = scmp.eq.s32.totalorder %s18, 1
      %p61 = por %p59, %p60
      %p62 = scmp.ne.s32.totalorder %s54, %s57
      %p63 = scmp.eq.s32.totalorder %s18, 0
      %p64 = por %p62, %p63
      %p65 = scmp.ne.s32.totalorder %s54, %s57
      %p66 = scmp.eq.s32.totalorder %s23, 1
      %p67 = por %p65, %p66
      %p68 = scmp.ne.s32.totalorder %s57, %s58
      %p69 = scmp.eq.s32.totalorder %s23, 0
      %p70 = por %p68, %p69
      %p71 = scmp.ne.s32.totalorder %s57, %s58
      %p72 = scmp.eq.s32.totalorder %s24, 1
      %p73 = por %p71, %p72
      %p75 = scmp.ne.s32.totalorder %s58, %s74
      %p76 = scmp.eq.s32.totalorder %s24, 0
      %p77 = por %p75, %p76
      %p78 = scmp.le.s32.totalorder 1, %s18
      %p79 = scmp.lt.s32.totalorder %s18, 3
      %p80 = pnand %p78, %p79
      %p81 = pneg %p80
      // Predicated region
      $region9: #{tpu_custom_call.1} parent=5 // pred_check
        _
      $region10: #{tpu_custom_call.1} parent=5 // pred_check_branch
        %83 = sbr.rel (%p80) target = $region12
      $region11: #{tpu_custom_call.1} parent=5 // pred_region
        %s84 = ssub.s32 %s18, 1
      $region12: #{tpu_custom_call.1} parent=5 // pred_fallthru
        _
      %p85 = scmp.lt.s32.totalorder %s18, 2
      // Predicated region
      $region13: #{tpu_custom_call.1} parent=5 // pred_check
        %p86 = pneg %p85
      $region14: #{tpu_custom_call.1} parent=5 // pred_check_branch
        %88 = sbr.rel (%p86) target = $region16
      $region15: #{tpu_custom_call.1} parent=5 // pred_region
        // Predicated region
        $region17: #{tpu_custom_call.1} parent=15 // pred_check
          %p89 = pneg %p38
        $region18: #{tpu_custom_call.1} parent=15 // pred_check_branch
          %91 = sbr.rel (%p89) target = $region20
        $region19: #{tpu_custom_call.1} parent=15 // pred_region
          %s92 = sand.u32 %s28, 1
          %s93 = scalar_lea.sflag [#allocation6], %s92
          %s94 = sand.u32 %s28, 1
          %s95 = smul.addr %s94, 64
          %s96 = scalar_lea.vmem [#allocation5], %s95
          %s98 = ssub.s32 1024, 1024
          %99 = vsyncadd %s93, %s98
          %s100 = smul.addr %s18, 8
          %s101 = smul.addr %s100, 128
          %s102 = scalar_lea.hbm %s1, %s101
          %s103 = sshll.u32 %s96, 4
          %s104 = int_to_ptr.vmem [resolvable:$true] %s103
          %109 = dma.hbm_to_vmem [thread:$0]  %s102, 1024, %s104, %s93, 128, 128, 8
        $region20: #{tpu_custom_call.1} parent=15 // pred_fallthru
          _
      $region16: #{tpu_custom_call.1} parent=5 // pred_fallthru
        _
      %p110 = scmp.le.s32.totalorder 1, %s18
      %p111 = scmp.lt.s32.totalorder %s18, 3
      %p112 = pnand %p110, %p111
      %p113 = pneg %p112
      // Predicated region
      $region21: #{tpu_custom_call.1} parent=5 // pred_check
        _
      $region22: #{tpu_custom_call.1} parent=5 // pred_check_branch
        %115 = sbr.rel (%p112) target = $region24
      $region23: #{tpu_custom_call.1} parent=5 // pred_region
        %s116 = ssub.s32 %s18, 1
        %s117 = sand.u32 %s31, 1
        %s118 = scalar_lea.sflag [#allocation6], %s117
        %s119 = sand.u32 %s31, 1
        %s120 = smul.addr %s119, 64
        %s121 = scalar_lea.vmem [#allocation5], %s120
        // Predicated region
        $region25: #{tpu_custom_call.1} parent=23 // pred_check
          %p122 = pneg %p44
        $region26: #{tpu_custom_call.1} parent=23 // pred_check_branch
          %124 = sbr.rel (%p122) target = $region28
        $region27: #{tpu_custom_call.1} parent=23 // pred_region
          %125 = dma.done %s118, 1024
        $region28: #{tpu_custom_call.1} parent=23 // pred_fallthru
          _
        %s126 = sand.u32 %s31, 1
        %s127 = scalar_lea.sflag [#allocation6], %s126
        %s128 = sand.u32 %s31, 1
        %s129 = smul.addr %s128, 64
        %s130 = scalar_lea.vmem [#allocation5], %s129
        %p131 = pneg %p44
        %p132 = pneg %p41
        %p133 = pneg %p70
        %p134 = pneg %p67
        %s135 = sand.u32 %s57, 1
        %s136 = scalar_lea.sflag [#allocation7], %s135
        %s137 = sand.u32 %s57, 1
        %s138 = smul.addr %s137, 64
        %s139 = scalar_lea.vmem [#allocation8], %s138
        %s140 = smul.u32 %s23, 2
        %s141 = sld [smem:[#allocation4 + %s140]]
        %p142 = scmp.gt.s32.totalorder %s141, 0
        %s143 = scalar_select %p142, %s141, 0
        %p144 = scmp.lt.s32.totalorder %s143, 6
        %s145 = scalar_select %p144, %s143, 6
        %s146 = sadd.s32 %s140, 1
        %s147 = sld [smem:[#allocation4 + %s146]]
        %p148 = scmp.gt.s32.totalorder %s147, 0
        %s149 = scalar_select %p148, %s147, 0
        %p150 = scmp.lt.s32.totalorder %s149, 6
        %s151 = scalar_select %p150, %s149, 6
        %p152 = scmp.eq.s32.totalorder %s151, 0
        // Predicated region
        $region29: #{tpu_custom_call.1} parent=23 // pred_check
          %p153 = pneg %p152
        $region30: #{tpu_custom_call.1} parent=23 // pred_check_branch
          %155 = sbr.rel (%p153) target = $region32
        $region31: #{tpu_custom_call.1} parent=23 // pred_region
          %v156 = vld [vmem:[%s121] sm:$0xff]
          %v157 = vld [vmem:[%s121 + $0x8] sm:$0x1f]
          %v158 = vld [vmem:[%s121 + $0x10] sm:$0xff]
          %v159 = vld [vmem:[%s121 + $0x18] sm:$0x1f]
          %v160 = vld [vmem:[%s121 + $0x20] sm:$0xff]
          %v161 = vld [vmem:[%s121 + $0x28] sm:$0x1f]
          %v162 = vld [vmem:[%s121 + $0x30] sm:$0xff]
          %v163 = vld [vmem:[%s121 + $0x38] sm:$0x1f]
          %vm164 = vcmask 130048
          %165 = vst.msk [vmem:[#allocation2 + $0x3] sm:$0xff] %vm164, %v156
          %vm166 = vcmask 126976
          %167 = vst.msk [vmem:[#allocation2 + $0xb] sm:$0x1f] %vm166, %v157
          %168 = vst.msk [vmem:[#allocation2 + $0x13] sm:$0xff] %vm164, %v158
          %169 = vst.msk [vmem:[#allocation2 + $0x1b] sm:$0x1f] %vm166, %v159
          %170 = vst.msk [vmem:[#allocation2 + $0x23] sm:$0xff] %vm164, %v160
          %171 = vst.msk [vmem:[#allocation2 + $0x2b] sm:$0x1f] %vm166, %v161
          %172 = vst.msk [vmem:[#allocation2 + $0x33] sm:$0xff] %vm164, %v162
          %173 = vst.msk [vmem:[#allocation2 + $0x3b] sm:$0x1f] %vm166, %v163
          %v174 = vld [vmem:[%s121] sm:$0x1]
          %v175 = vld [vmem:[%s121 + $0x10] sm:$0x1]
          %v176 = vld [vmem:[%s121 + $0x20] sm:$0x1]
          %v177 = vld [vmem:[%s121 + $0x30] sm:$0x1]
          %v178 = vlaneseq
          %v179 = vshrl.u32 %v178, 7
          %v180 = vsub.s32 0, %v179
          %v181 = vrot.slane %v174, %v180
          %v182 = vlaneseq
          %v183 = vshrl.u32 %v182, 7
          %v184 = vsub.s32 0, %v183
          %v185 = vrot.slane %v175, %v184
          %v186 = vlaneseq
          %v187 = vshrl.u32 %v186, 7
          %v188 = vsub.s32 0, %v187
          %v189 = vrot.slane %v176, %v188
          %v190 = vlaneseq
          %v191 = vshrl.u32 %v190, 7
          %v192 = vsub.s32 0, %v191
          %v193 = vrot.slane %v177, %v192
          %vm194 = vcmask 124928
          %195 = vst.msk [vmem:[#allocation2] sm:$0x7] %vm194, %v181
          %196 = vst.msk [vmem:[#allocation2 + $0x10] sm:$0x7] %vm194, %v185
          %197 = vst.msk [vmem:[#allocation2 + $0x20] sm:$0x7] %vm194, %v189
          %198 = vst.msk [vmem:[#allocation2 + $0x30] sm:$0x7] %vm194, %v193
        $region32: #{tpu_custom_call.1} parent=23 // pred_fallthru
          _
        %p199 = scmp.eq.s32.totalorder %s151, 1
        // Predicated region
        $region33: #{tpu_custom_call.1} parent=23 // pred_check
          %p200 = pneg %p199
        $region34: #{tpu_custom_call.1} parent=23 // pred_check_branch
          %202 = sbr.rel (%p200) target = $region36
        $region35: #{tpu_custom_call.1} parent=23 // pred_region
          %v203 = vld [vmem:[%s121] sm:$0xff]
          %v204 = vld [vmem:[%s121 + $0x8] sm:$0x3f]
          %v205 = vld [vmem:[%s121 + $0x10] sm:$0xff]
          %v206 = vld [vmem:[%s121 + $0x18] sm:$0x3f]
          %v207 = vld [vmem:[%s121 + $0x20] sm:$0xff]
          %v208 = vld [vmem:[%s121 + $0x28] sm:$0x3f]
          %v209 = vld [vmem:[%s121 + $0x30] sm:$0xff]
          %v210 = vld [vmem:[%s121 + $0x38] sm:$0x3f]
          %vm211 = vcmask 130048
          %212 = vst.msk [vmem:[#allocation2 + $0x2] sm:$0xff] %vm211, %v203
          %vm213 = vcmask 128000
          %214 = vst.msk [vmem:[#allocation2 + $0xa] sm:$0x3f] %vm213, %v204
          %215 = vst.msk [vmem:[#allocation2 + $0x12] sm:$0xff] %vm211, %v205
          %216 = vst.msk [vmem:[#allocation2 + $0x1a] sm:$0x3f] %vm213, %v206
          %217 = vst.msk [vmem:[#allocation2 + $0x22] sm:$0xff] %vm211, %v207
          %218 = vst.msk [vmem:[#allocation2 + $0x2a] sm:$0x3f] %vm213, %v208
          %219 = vst.msk [vmem:[#allocation2 + $0x32] sm:$0xff] %vm211, %v209
          %220 = vst.msk [vmem:[#allocation2 + $0x3a] sm:$0x3f] %vm213, %v210
          %v221 = vld [vmem:[%s121] sm:$0x1]
          %v222 = vld [vmem:[%s121 + $0x10] sm:$0x1]
          %v223 = vld [vmem:[%s121 + $0x20] sm:$0x1]
          %v224 = vld [vmem:[%s121 + $0x30] sm:$0x1]
          %v225 = vlaneseq
          %v226 = vshrl.u32 %v225, 7
          %v227 = vsub.s32 0, %v226
          %v228 = vrot.slane %v221, %v227
          %v229 = vlaneseq
          %v230 = vshrl.u32 %v229, 7
          %v231 = vsub.s32 0, %v230
          %v232 = vrot.slane %v222, %v231
          %v233 = vlaneseq
          %v234 = vshrl.u32 %v233, 7
          %v235 = vsub.s32 0, %v234
          %v236 = vrot.slane %v223, %v235
          %v237 = vlaneseq
          %v238 = vshrl.u32 %v237, 7
          %v239 = vsub.s32 0, %v238
          %v240 = vrot.slane %v224, %v239
          %vm241 = vcmask 123904
          %242 = vst.msk [vmem:[#allocation2] sm:$0x3] %vm241, %v228
          %243 = vst.msk [vmem:[#allocation2 + $0x10] sm:$0x3] %vm241, %v232
          %244 = vst.msk [vmem:[#allocation2 + $0x20] sm:$0x3] %vm241, %v236
          %245 = vst.msk [vmem:[#allocation2 + $0x30] sm:$0x3] %vm241, %v240
        $region36: #{tpu_custom_call.1} parent=23 // pred_fallthru
          _
        %p246 = scmp.eq.s32.totalorder %s151, 2
        // Predicated region
        $region37: #{tpu_custom_call.1} parent=23 // pred_check
          %p247 = pneg %p246
        $region38: #{tpu_custom_call.1} parent=23 // pred_check_branch
          %249 = sbr.rel (%p247) target = $region40
        $region39: #{tpu_custom_call.1} parent=23 // pred_region
          %v250 = vld [vmem:[%s121] sm:$0xff]
          %v251 = vld [vmem:[%s121 + $0x8] sm:$0x7f]
          %v252 = vld [vmem:[%s121 + $0x10] sm:$0xff]
          %v253 = vld [vmem:[%s121 + $0x18] sm:$0x7f]
          %v254 = vld [vmem:[%s121 + $0x20] sm:$0xff]
          %v255 = vld [vmem:[%s121 + $0x28] sm:$0x7f]
          %v256 = vld [vmem:[%s121 + $0x30] sm:$0xff]
          %v257 = vld [vmem:[%s121 + $0x38] sm:$0x7f]
          %vm258 = vcmask 130048
          %259 = vst.msk [vmem:[#allocation2 + $0x1] sm:$0xff] %vm258, %v250
          %vm260 = vcmask 129024
          %261 = vst.msk [vmem:[#allocation2 + $0x9] sm:$0x7f] %vm260, %v251
          %262 = vst.msk [vmem:[#allocation2 + $0x11] sm:$0xff] %vm258, %v252
          %263 = vst.msk [vmem:[#allocation2 + $0x19] sm:$0x7f] %vm260, %v253
          %264 = vst.msk [vmem:[#allocation2 + $0x21] sm:$0xff] %vm258, %v254
          %265 = vst.msk [vmem:[#allocation2 + $0x29] sm:$0x7f] %vm260, %v255
          %266 = vst.msk [vmem:[#allocation2 + $0x31] sm:$0xff] %vm258, %v256
          %267 = vst.msk [vmem:[#allocation2 + $0x39] sm:$0x7f] %vm260, %v257
          %v268 = vld [vmem:[%s121] sm:$0x1]
          %v269 = vld [vmem:[%s121 + $0x10] sm:$0x1]
          %v270 = vld [vmem:[%s121 + $0x20] sm:$0x1]
          %v271 = vld [vmem:[%s121 + $0x30] sm:$0x1]
          %vm272 = vcmask 122880
          %273 = vst.msk [vmem:[#allocation2] sm:$0x1] %vm272, %v268
          %274 = vst.msk [vmem:[#allocation2 + $0x10] sm:$0x1] %vm272, %v269
          %275 = vst.msk [vmem:[#allocation2 + $0x20] sm:$0x1] %vm272, %v270
          %276 = vst.msk [vmem:[#allocation2 + $0x30] sm:$0x1] %vm272, %v271
        $region40: #{tpu_custom_call.1} parent=23 // pred_fallthru
          _
        %p277 = scmp.eq.s32.totalorder %s151, 3
        // Predicated region
        $region41: #{tpu_custom_call.1} parent=23 // pred_check
          %p278 = pneg %p277
        $region42: #{tpu_custom_call.1} parent=23 // pred_check_branch
          %280 = sbr.rel (%p278) target = $region44
        $region43: #{tpu_custom_call.1} parent=23 // pred_region
          %v281 = vld [vmem:[%s121] sm:$0xff]
          %v282 = vld [vmem:[%s121 + $0x8] sm:$0xff]
          %v283 = vld [vmem:[%s121 + $0x10] sm:$0xff]
          %v284 = vld [vmem:[%s121 + $0x18] sm:$0xff]
          %v285 = vld [vmem:[%s121 + $0x20] sm:$0xff]
          %v286 = vld [vmem:[%s121 + $0x28] sm:$0xff]
          %v287 = vld [vmem:[%s121 + $0x30] sm:$0xff]
          %v288 = vld [vmem:[%s121 + $0x38] sm:$0xff]
          %vm289 = vcmask 130048
          %290 = vst.msk [vmem:[#allocation2] sm:$0xff] %vm289, %v281
          %291 = vst.msk [vmem:[#allocation2 + $0x8] sm:$0xff] %vm289, %v282
          %292 = vst.msk [vmem:[#allocation2 + $0x10] sm:$0xff] %vm289, %v283
          %293 = vst.msk [vmem:[#allocation2 + $0x18] sm:$0xff] %vm289, %v284
          %294 = vst.msk [vmem:[#allocation2 + $0x20] sm:$0xff] %vm289, %v285
          %295 = vst.msk [vmem:[#allocation2 + $0x28] sm:$0xff] %vm289, %v286
          %296 = vst.msk [vmem:[#allocation2 + $0x30] sm:$0xff] %vm289, %v287
          %297 = vst.msk [vmem:[#allocation2 + $0x38] sm:$0xff] %vm289, %v288
        $region44: #{tpu_custom_call.1} parent=23 // pred_fallthru
          _
        %p298 = scmp.eq.s32.totalorder %s151, 4
        // Predicated region
        $region45: #{tpu_custom_call.1} parent=23 // pred_check
          %p299 = pneg %p298
        $region46: #{tpu_custom_call.1} parent=23 // pred_check_branch
          %301 = sbr.rel (%p299) target = $region48
        $region47: #{tpu_custom_call.1} parent=23 // pred_region
          %v302 = vld [vmem:[%s121 + $0x1] sm:$0xff]
          %v303 = vld [vmem:[%s121 + $0x9] sm:$0x7f]
          %v304 = vld [vmem:[%s121 + $0x11] sm:$0xff]
          %v305 = vld [vmem:[%s121 + $0x19] sm:$0x7f]
          %v306 = vld [vmem:[%s121 + $0x21] sm:$0xff]
          %v307 = vld [vmem:[%s121 + $0x29] sm:$0x7f]
          %v308 = vld [vmem:[%s121 + $0x31] sm:$0xff]
          %v309 = vld [vmem:[%s121 + $0x39] sm:$0x7f]
          %vm310 = vcmask 130048
          %311 = vst.msk [vmem:[#allocation2] sm:$0xff] %vm310, %v302
          %vm312 = vcmask 129024
          %313 = vst.msk [vmem:[#allocation2 + $0x8] sm:$0x7f] %vm312, %v303
          %314 = vst.msk [vmem:[#allocation2 + $0x10] sm:$0xff] %vm310, %v304
          %315 = vst.msk [vmem:[#allocation2 + $0x18] sm:$0x7f] %vm312, %v305
          %316 = vst.msk [vmem:[#allocation2 + $0x20] sm:$0xff] %vm310, %v306
          %317 = vst.msk [vmem:[#allocation2 + $0x28] sm:$0x7f] %vm312, %v307
          %318 = vst.msk [vmem:[#allocation2 + $0x30] sm:$0xff] %vm310, %v308
          %319 = vst.msk [vmem:[#allocation2 + $0x38] sm:$0x7f] %vm312, %v309
          %v320 = vld [vmem:[%s121 + $0xf] sm:$0x1]
          %v321 = vld [vmem:[%s121 + $0x1f] sm:$0x1]
          %v322 = vld [vmem:[%s121 + $0x2f] sm:$0x1]
          %v323 = vld [vmem:[%s121 + $0x3f] sm:$0x1]
          %vm324 = vcmask 122880
          %325 = vst.msk [vmem:[#allocation2 + $0xf] sm:$0x1] %vm324, %v320
          %326 = vst.msk [vmem:[#allocation2 + $0x1f] sm:$0x1] %vm324, %v321
          %327 = vst.msk [vmem:[#allocation2 + $0x2f] sm:$0x1] %vm324, %v322
          %328 = vst.msk [vmem:[#allocation2 + $0x3f] sm:$0x1] %vm324, %v323
        $region48: #{tpu_custom_call.1} parent=23 // pred_fallthru
          _
        %p329 = scmp.eq.s32.totalorder %s151, 5
        // Predicated region
        $region49: #{tpu_custom_call.1} parent=23 // pred_check
          %p330 = pneg %p329
        $region50: #{tpu_custom_call.1} parent=23 // pred_check_branch
          %332 = sbr.rel (%p330) target = $region52
        $region51: #{tpu_custom_call.1} parent=23 // pred_region
          %v333 = vld [vmem:[%s121 + $0x2] sm:$0xff]
          %v334 = vld [vmem:[%s121 + $0xa] sm:$0x3f]
          %v335 = vld [vmem:[%s121 + $0x12] sm:$0xff]
          %v336 = vld [vmem:[%s121 + $0x1a] sm:$0x3f]
          %v337 = vld [vmem:[%s121 + $0x22] sm:$0xff]
          %v338 = vld [vmem:[%s121 + $0x2a] sm:$0x3f]
          %v339 = vld [vmem:[%s121 + $0x32] sm:$0xff]
          %v340 = vld [vmem:[%s121 + $0x3a] sm:$0x3f]
          %vm341 = vcmask 130048
          %342 = vst.msk [vmem:[#allocation2] sm:$0xff] %vm341, %v333
          %vm343 = vcmask 128000
          %344 = vst.msk [vmem:[#allocation2 + $0x8] sm:$0x3f] %vm343, %v334
          %345 = vst.msk [vmem:[#allocation2 + $0x10] sm:$0xff] %vm341, %v335
          %346 = vst.msk [vmem:[#allocation2 + $0x18] sm:$0x3f] %vm343, %v336
          %347 = vst.msk [vmem:[#allocation2 + $0x20] sm:$0xff] %vm341, %v337
          %348 = vst.msk [vmem:[#allocation2 + $0x28] sm:$0x3f] %vm343, %v338
          %349 = vst.msk [vmem:[#allocation2 + $0x30] sm:$0xff] %vm341, %v339
          %350 = vst.msk [vmem:[#allocation2 + $0x38] sm:$0x3f] %vm343, %v340
          %v351 = vld [vmem:[%s121 + $0xf] sm:$0x1]
          %v352 = vld [vmem:[%s121 + $0x1f] sm:$0x1]
          %v353 = vld [vmem:[%s121 + $0x2f] sm:$0x1]
          %v354 = vld [vmem:[%s121 + $0x3f] sm:$0x1]
          %v355 = vlaneseq
          %v356 = vshrl.u32 %v355, 7
          %v357 = vsub.s32 0, %v356
          %v358 = vrot.slane %v351, %v357
          %v359 = vlaneseq
          %v360 = vshrl.u32 %v359, 7
          %v361 = vsub.s32 0, %v360
          %v362 = vrot.slane %v352, %v361
          %v363 = vlaneseq
          %v364 = vshrl.u32 %v363, 7
          %v365 = vsub.s32 0, %v364
          %v366 = vrot.slane %v353, %v365
          %v367 = vlaneseq
          %v368 = vshrl.u32 %v367, 7
          %v369 = vsub.s32 0, %v368
          %v370 = vrot.slane %v354, %v369
          %vm371 = vcmask 123904
          %372 = vst.msk [vmem:[#allocation2 + $0xe] sm:$0x3] %vm371, %v358
          %373 = vst.msk [vmem:[#allocation2 + $0x1e] sm:$0x3] %vm371, %v362
          %374 = vst.msk [vmem:[#allocation2 + $0x2e] sm:$0x3] %vm371, %v366
          %375 = vst.msk [vmem:[#allocation2 + $0x3e] sm:$0x3] %vm371, %v370
        $region52: #{tpu_custom_call.1} parent=23 // pred_fallthru
          _
        %p376 = scmp.eq.s32.totalorder %s151, 6
        // Predicated region
        $region53: #{tpu_custom_call.1} parent=23 // pred_check
          %p377 = pneg %p376
        $region54: #{tpu_custom_call.1} parent=23 // pred_check_branch
          %379 = sbr.rel (%p377) target = $region56
        $region55: #{tpu_custom_call.1} parent=23 // pred_region
          %v380 = vld [vmem:[%s121 + $0x3] sm:$0xff]
          %v381 = vld [vmem:[%s121 + $0xb] sm:$0x1f]
          %v382 = vld [vmem:[%s121 + $0x13] sm:$0xff]
          %v383 = vld [vmem:[%s121 + $0x1b] sm:$0x1f]
          %v384 = vld [vmem:[%s121 + $0x23] sm:$0xff]
          %v385 = vld [vmem:[%s121 + $0x2b] sm:$0x1f]
          %v386 = vld [vmem:[%s121 + $0x33] sm:$0xff]
          %v387 = vld [vmem:[%s121 + $0x3b] sm:$0x1f]
          %vm388 = vcmask 130048
          %389 = vst.msk [vmem:[#allocation2] sm:$0xff] %vm388, %v380
          %vm390 = vcmask 126976
          %391 = vst.msk [vmem:[#allocation2 + $0x8] sm:$0x1f] %vm390, %v381
          %392 = vst.msk [vmem:[#allocation2 + $0x10] sm:$0xff] %vm388, %v382
          %393 = vst.msk [vmem:[#allocation2 + $0x18] sm:$0x1f] %vm390, %v383
          %394 = vst.msk [vmem:[#allocation2 + $0x20] sm:$0xff] %vm388, %v384
          %395 = vst.msk [vmem:[#allocation2 + $0x28] sm:$0x1f] %vm390, %v385
          %396 = vst.msk [vmem:[#allocation2 + $0x30] sm:$0xff] %vm388, %v386
          %397 = vst.msk [vmem:[#allocation2 + $0x38] sm:$0x1f] %vm390, %v387
          %v398 = vld [vmem:[%s121 + $0xf] sm:$0x1]
          %v399 = vld [vmem:[%s121 + $0x1f] sm:$0x1]
          %v400 = vld [vmem:[%s121 + $0x2f] sm:$0x1]
          %v401 = vld [vmem:[%s121 + $0x3f] sm:$0x1]
          %v402 = vlaneseq
          %v403 = vshrl.u32 %v402, 7
          %v404 = vsub.s32 0, %v403
          %v405 = vrot.slane %v398, %v404
          %v406 = vlaneseq
          %v407 = vshrl.u32 %v406, 7
          %v408 = vsub.s32 0, %v407
          %v409 = vrot.slane %v399, %v408
          %v410 = vlaneseq
          %v411 = vshrl.u32 %v410, 7
          %v412 = vsub.s32 0, %v411
          %v413 = vrot.slane %v400, %v412
          %v414 = vlaneseq
          %v415 = vshrl.u32 %v414, 7
          %v416 = vsub.s32 0, %v415
          %v417 = vrot.slane %v401, %v416
          %vm418 = vcmask 124928
          %419 = vst.msk [vmem:[#allocation2 + $0xd] sm:$0x7] %vm418, %v405
          %420 = vst.msk [vmem:[#allocation2 + $0x1d] sm:$0x7] %vm418, %v409
          %421 = vst.msk [vmem:[#allocation2 + $0x2d] sm:$0x7] %vm418, %v413
          %422 = vst.msk [vmem:[#allocation2 + $0x3d] sm:$0x7] %vm418, %v417
        $region56: #{tpu_custom_call.1} parent=23 // pred_fallthru
          _
        %p423 = scmp.eq.s32.totalorder %s145, 0
        // Predicated region
        $region57: #{tpu_custom_call.1} parent=23 // pred_check
          %p424 = pneg %p423
        $region58: #{tpu_custom_call.1} parent=23 // pred_check_branch
          %426 = sbr.rel (%p424) target = $region60
        $region59: #{tpu_custom_call.1} parent=23 // pred_region
          %v427 = vld [vmem:[#allocation2] sm:$0xff]
          %v428 = vld [vmem:[#allocation2 + $0x8] sm:$0xff]
          %v429 = vld [vmem:[#allocation2 + $0x10] sm:$0xff]
          %v430 = vld [vmem:[#allocation2 + $0x18] sm:$0xff]
          %v431 = vld [vmem:[#allocation2 + $0x20] sm:$0xff]
          %v432 = vld [vmem:[#allocation2 + $0x28] sm:$0xff]
          %v433 = vld [vmem:[#allocation2 + $0x30] sm:$0xff]
          %v434 = vld [vmem:[#allocation2 + $0x38] sm:$0xff]
          %443 = vrot.lane.b32.xlu0 %v427, 3
          %v444 = vpop.permute.xlu0 %443
          %445 = vrot.lane.b32.xlu0 %v428, 3
          %v446 = vpop.permute.xlu0 %445
          %447 = vrot.lane.b32.xlu0 %v429, 3
          %v448 = vpop.permute.xlu0 %447
          %449 = vrot.lane.b32.xlu0 %v430, 3
          %v450 = vpop.permute.xlu0 %449
          %451 = vrot.lane.b32.xlu0 %v431, 3
          %v452 = vpop.permute.xlu0 %451
          %453 = vrot.lane.b32.xlu0 %v432, 3
          %v454 = vpop.permute.xlu0 %453
          %455 = vrot.lane.b32.xlu0 %v433, 3
          %v456 = vpop.permute.xlu0 %455
          %457 = vrot.lane.b32.xlu0 %v434, 3
          %v458 = vpop.permute.xlu0 %457
          %vm467 = vcmask 130072
          %468 = vst.msk [vmem:[%s139] sm:$0xff] %vm467, %v444
          %469 = vst.msk [vmem:[%s139 + $0x8] sm:$0xff] %vm467, %v446
          %470 = vst.msk [vmem:[%s139 + $0x10] sm:$0xff] %vm467, %v448
          %471 = vst.msk [vmem:[%s139 + $0x18] sm:$0xff] %vm467, %v450
          %472 = vst.msk [vmem:[%s139 + $0x20] sm:$0xff] %vm467, %v452
          %473 = vst.msk [vmem:[%s139 + $0x28] sm:$0xff] %vm467, %v454
          %474 = vst.msk [vmem:[%s139 + $0x30] sm:$0xff] %vm467, %v456
          %475 = vst.msk [vmem:[%s139 + $0x38] sm:$0xff] %vm467, %v458
          %v476 = vld [vmem:[#allocation2] sm:$0xff]
          %v477 = vld [vmem:[#allocation2 + $0x8] sm:$0xff]
          %v478 = vld [vmem:[#allocation2 + $0x10] sm:$0xff]
          %v479 = vld [vmem:[#allocation2 + $0x18] sm:$0xff]
          %v480 = vld [vmem:[#allocation2 + $0x20] sm:$0xff]
          %v481 = vld [vmem:[#allocation2 + $0x28] sm:$0xff]
          %v482 = vld [vmem:[#allocation2 + $0x30] sm:$0xff]
          %v483 = vld [vmem:[#allocation2 + $0x38] sm:$0xff]
          %485 = vset.pattern.permute.xlu0 0
          %486 = vperm.xlu0 %485, %v476
          %v487 = vpop.permute.xlu0 %486
          %490 = vset.pattern.permute.xlu0 0
          %491 = vperm.xlu0 %490, %v477
          %v492 = vpop.permute.xlu0 %491
          %495 = vset.pattern.permute.xlu0 0
          %496 = vperm.xlu0 %495, %v478
          %v497 = vpop.permute.xlu0 %496
          %500 = vset.pattern.permute.xlu0 0
          %501 = vperm.xlu0 %500, %v479
          %v502 = vpop.permute.xlu0 %501
          %505 = vset.pattern.permute.xlu0 0
          %506 = vperm.xlu0 %505, %v480
          %v507 = vpop.permute.xlu0 %506
          %510 = vset.pattern.permute.xlu0 0
          %511 = vperm.xlu0 %510, %v481
          %v512 = vpop.permute.xlu0 %511
          %515 = vset.pattern.permute.xlu0 0
          %516 = vperm.xlu0 %515, %v482
          %v517 = vpop.permute.xlu0 %516
          %520 = vset.pattern.permute.xlu0 0
          %521 = vperm.xlu0 %520, %v483
          %v522 = vpop.permute.xlu0 %521
          %vm524 = vcmask 23552
          %525 = vst.msk [vmem:[%s139] sm:$0xff] %vm524, %v487
          %526 = vst.msk [vmem:[%s139 + $0x8] sm:$0xff] %vm524, %v492
          %527 = vst.msk [vmem:[%s139 + $0x10] sm:$0xff] %vm524, %v497
          %528 = vst.msk [vmem:[%s139 + $0x18] sm:$0xff] %vm524, %v502
          %529 = vst.msk [vmem:[%s139 + $0x20] sm:$0xff] %vm524, %v507
          %530 = vst.msk [vmem:[%s139 + $0x28] sm:$0xff] %vm524, %v512
          %531 = vst.msk [vmem:[%s139 + $0x30] sm:$0xff] %vm524, %v517
          %532 = vst.msk [vmem:[%s139 + $0x38] sm:$0xff] %vm524, %v522
        $region60: #{tpu_custom_call.1} parent=23 // pred_fallthru
          _
        %p533 = scmp.eq.s32.totalorder %s145, 1
        // Predicated region
        $region61: #{tpu_custom_call.1} parent=23 // pred_check
          %p534 = pneg %p533
        $region62: #{tpu_custom_call.1} parent=23 // pred_check_branch
          %536 = sbr.rel (%p534) target = $region64
        $region63: #{tpu_custom_call.1} parent=23 // pred_region
          %v537 = vld [vmem:[#allocation2] sm:$0xff]
          %v538 = vld [vmem:[#allocation2 + $0x8] sm:$0xff]
          %v539 = vld [vmem:[#allocation2 + $0x10] sm:$0xff]
          %v540 = vld [vmem:[#allocation2 + $0x18] sm:$0xff]
          %v541 = vld [vmem:[#allocation2 + $0x20] sm:$0xff]
          %v542 = vld [vmem:[#allocation2 + $0x28] sm:$0xff]
          %v543 = vld [vmem:[#allocation2 + $0x30] sm:$0xff]
          %v544 = vld [vmem:[#allocation2 + $0x38] sm:$0xff]
          %553 = vrot.lane.b32.xlu0 %v537, 2
          %v554 = vpop.permute.xlu0 %553
          %555 = vrot.lane.b32.xlu0 %v538, 2
          %v556 = vpop.permute.xlu0 %555
          %557 = vrot.lane.b32.xlu0 %v539, 2
          %v558 = vpop.permute.xlu0 %557
          %559 = vrot.lane.b32.xlu0 %v540, 2
          %v560 = vpop.permute.xlu0 %559
          %561 = vrot.lane.b32.xlu0 %v541, 2
          %v562 = vpop.permute.xlu0 %561
          %563 = vrot.lane.b32.xlu0 %v542, 2
          %v564 = vpop.permute.xlu0 %563
          %565 = vrot.lane.b32.xlu0 %v543, 2
          %v566 = vpop.permute.xlu0 %565
          %567 = vrot.lane.b32.xlu0 %v544, 2
          %v568 = vpop.permute.xlu0 %567
          %vm577 = vcmask 130064
          %578 = vst.msk [vmem:[%s139] sm:$0xff] %vm577, %v554
          %579 = vst.msk [vmem:[%s139 + $0x8] sm:$0xff] %vm577, %v556
          %580 = vst.msk [vmem:[%s139 + $0x10] sm:$0xff] %vm577, %v558
          %581 = vst.msk [vmem:[%s139 + $0x18] sm:$0xff] %vm577, %v560
          %582 = vst.msk [vmem:[%s139 + $0x20] sm:$0xff] %vm577, %v562
          %583 = vst.msk [vmem:[%s139 + $0x28] sm:$0xff] %vm577, %v564
          %584 = vst.msk [vmem:[%s139 + $0x30] sm:$0xff] %vm577, %v566
          %585 = vst.msk [vmem:[%s139 + $0x38] sm:$0xff] %vm577, %v568
          %v586 = vld [vmem:[#allocation2] sm:$0xff]
          %v587 = vld [vmem:[#allocation2 + $0x8] sm:$0xff]
          %v588 = vld [vmem:[#allocation2 + $0x10] sm:$0xff]
          %v589 = vld [vmem:[#allocation2 + $0x18] sm:$0xff]
          %v590 = vld [vmem:[#allocation2 + $0x20] sm:$0xff]
          %v591 = vld [vmem:[#allocation2 + $0x28] sm:$0xff]
          %v592 = vld [vmem:[#allocation2 + $0x30] sm:$0xff]
          %v593 = vld [vmem:[#allocation2 + $0x38] sm:$0xff]
          %595 = vset.pattern.permute.xlu0 0
          %596 = vperm.xlu0 %595, %v586
          %v597 = vpop.permute.xlu0 %596
          %600 = vset.pattern.permute.xlu0 0
          %601 = vperm.xlu0 %600, %v587
          %v602 = vpop.permute.xlu0 %601
          %605 = vset.pattern.permute.xlu0 0
          %606 = vperm.xlu0 %605, %v588
          %v607 = vpop.permute.xlu0 %606
          %610 = vset.pattern.permute.xlu0 0
          %611 = vperm.xlu0 %610, %v589
          %v612 = vpop.permute.xlu0 %611
          %615 = vset.pattern.permute.xlu0 0
          %616 = vperm.xlu0 %615, %v590
          %v617 = vpop.permute.xlu0 %616
          %620 = vset.pattern.permute.xlu0 0
          %621 = vperm.xlu0 %620, %v591
          %v622 = vpop.permute.xlu0 %621
          %625 = vset.pattern.permute.xlu0 0
          %626 = vperm.xlu0 %625, %v592
          %v627 = vpop.permute.xlu0 %626
          %630 = vset.pattern.permute.xlu0 0
          %631 = vperm.xlu0 %630, %v593
          %v632 = vpop.permute.xlu0 %631
          %vm634 = vcmask 15360
          %635 = vst.msk [vmem:[%s139] sm:$0xff] %vm634, %v597
          %636 = vst.msk [vmem:[%s139 + $0x8] sm:$0xff] %vm634, %v602
          %637 = vst.msk [vmem:[%s139 + $0x10] sm:$0xff] %vm634, %v607
          %638 = vst.msk [vmem:[%s139 + $0x18] sm:$0xff] %vm634, %v612
          %639 = vst.msk [vmem:[%s139 + $0x20] sm:$0xff] %vm634, %v617
          %640 = vst.msk [vmem:[%s139 + $0x28] sm:$0xff] %vm634, %v622
          %641 = vst.msk [vmem:[%s139 + $0x30] sm:$0xff] %vm634, %v627
          %642 = vst.msk [vmem:[%s139 + $0x38] sm:$0xff] %vm634, %v632
        $region64: #{tpu_custom_call.1} parent=23 // pred_fallthru
          _
        %p643 = scmp.eq.s32.totalorder %s145, 2
        // Predicated region
        $region65: #{tpu_custom_call.1} parent=23 // pred_check
          %p644 = pneg %p643
        $region66: #{tpu_custom_call.1} parent=23 // pred_check_branch
          %646 = sbr.rel (%p644) target = $region68
        $region67: #{tpu_custom_call.1} parent=23 // pred_region
          %v647 = vld [vmem:[#allocation2] sm:$0xff]
          %v648 = vld [vmem:[#allocation2 + $0x8] sm:$0xff]
          %v649 = vld [vmem:[#allocation2 + $0x10] sm:$0xff]
          %v650 = vld [vmem:[#allocation2 + $0x18] sm:$0xff]
          %v651 = vld [vmem:[#allocation2 + $0x20] sm:$0xff]
          %v652 = vld [vmem:[#allocation2 + $0x28] sm:$0xff]
          %v653 = vld [vmem:[#allocation2 + $0x30] sm:$0xff]
          %v654 = vld [vmem:[#allocation2 + $0x38] sm:$0xff]
          %663 = vrot.lane.b32.xlu0 %v647, 1
          %v664 = vpop.permute.xlu0 %663
          %665 = vrot.lane.b32.xlu0 %v648, 1
          %v666 = vpop.permute.xlu0 %665
          %667 = vrot.lane.b32.xlu0 %v649, 1
          %v668 = vpop.permute.xlu0 %667
          %669 = vrot.lane.b32.xlu0 %v650, 1
          %v670 = vpop.permute.xlu0 %669
          %671 = vrot.lane.b32.xlu0 %v651, 1
          %v672 = vpop.permute.xlu0 %671
          %673 = vrot.lane.b32.xlu0 %v652, 1
          %v674 = vpop.permute.xlu0 %673
          %675 = vrot.lane.b32.xlu0 %v653, 1
          %v676 = vpop.permute.xlu0 %675
          %677 = vrot.lane.b32.xlu0 %v654, 1
          %v678 = vpop.permute.xlu0 %677
          %vm687 = vcmask 130056
          %688 = vst.msk [vmem:[%s139] sm:$0xff] %vm687, %v664
          %689 = vst.msk [vmem:[%s139 + $0x8] sm:$0xff] %vm687, %v666
          %690 = vst.msk [vmem:[%s139 + $0x10] sm:$0xff] %vm687, %v668
          %691 = vst.msk [vmem:[%s139 + $0x18] sm:$0xff] %vm687, %v670
          %692 = vst.msk [vmem:[%s139 + $0x20] sm:$0xff] %vm687, %v672
          %693 = vst.msk [vmem:[%s139 + $0x28] sm:$0xff] %vm687, %v674
          %694 = vst.msk [vmem:[%s139 + $0x30] sm:$0xff] %vm687, %v676
          %695 = vst.msk [vmem:[%s139 + $0x38] sm:$0xff] %vm687, %v678
          %v696 = vld [vmem:[#allocation2] sm:$0xff]
          %v697 = vld [vmem:[#allocation2 + $0x8] sm:$0xff]
          %v698 = vld [vmem:[#allocation2 + $0x10] sm:$0xff]
          %v699 = vld [vmem:[#allocation2 + $0x18] sm:$0xff]
          %v700 = vld [vmem:[#allocation2 + $0x20] sm:$0xff]
          %v701 = vld [vmem:[#allocation2 + $0x28] sm:$0xff]
          %v702 = vld [vmem:[#allocation2 + $0x30] sm:$0xff]
          %v703 = vld [vmem:[#allocation2 + $0x38] sm:$0xff]
          %vm704 = vcmask 7168
          %705 = vst.msk [vmem:[%s139] sm:$0xff] %vm704, %v696
          %706 = vst.msk [vmem:[%s139 + $0x8] sm:$0xff] %vm704, %v697
          %707 = vst.msk [vmem:[%s139 + $0x10] sm:$0xff] %vm704, %v698
          %708 = vst.msk [vmem:[%s139 + $0x18] sm:$0xff] %vm704, %v699
          %709 = vst.msk [vmem:[%s139 + $0x20] sm:$0xff] %vm704, %v700
          %710 = vst.msk [vmem:[%s139 + $0x28] sm:$0xff] %vm704, %v701
          %711 = vst.msk [vmem:[%s139 + $0x30] sm:$0xff] %vm704, %v702
          %712 = vst.msk [vmem:[%s139 + $0x38] sm:$0xff] %vm704, %v703
        $region68: #{tpu_custom_call.1} parent=23 // pred_fallthru
          _
        %p713 = scmp.eq.s32.totalorder %s145, 3
        // Predicated region
        $region69: #{tpu_custom_call.1} parent=23 // pred_check
          %p714 = pneg %p713
        $region70: #{tpu_custom_call.1} parent=23 // pred_check_branch
          %716 = sbr.rel (%p714) target = $region72
        $region71: #{tpu_custom_call.1} parent=23 // pred_region
          %v717 = vld [vmem:[#allocation2] sm:$0xff]
          %v718 = vld [vmem:[#allocation2 + $0x8] sm:$0xff]
          %v719 = vld [vmem:[#allocation2 + $0x10] sm:$0xff]
          %v720 = vld [vmem:[#allocation2 + $0x18] sm:$0xff]
          %v721 = vld [vmem:[#allocation2 + $0x20] sm:$0xff]
          %v722 = vld [vmem:[#allocation2 + $0x28] sm:$0xff]
          %v723 = vld [vmem:[#allocation2 + $0x30] sm:$0xff]
          %v724 = vld [vmem:[#allocation2 + $0x38] sm:$0xff]
          %vm725 = vcmask 130048
          %726 = vst.msk [vmem:[%s139] sm:$0xff] %vm725, %v717
          %727 = vst.msk [vmem:[%s139 + $0x8] sm:$0xff] %vm725, %v718
          %728 = vst.msk [vmem:[%s139 + $0x10] sm:$0xff] %vm725, %v719
          %729 = vst.msk [vmem:[%s139 + $0x18] sm:$0xff] %vm725, %v720
          %730 = vst.msk [vmem:[%s139 + $0x20] sm:$0xff] %vm725, %v721
          %731 = vst.msk [vmem:[%s139 + $0x28] sm:$0xff] %vm725, %v722
          %732 = vst.msk [vmem:[%s139 + $0x30] sm:$0xff] %vm725, %v723
          %733 = vst.msk [vmem:[%s139 + $0x38] sm:$0xff] %vm725, %v724
        $region72: #{tpu_custom_call.1} parent=23 // pred_fallthru
          _
        %p734 = scmp.eq.s32.totalorder %s145, 4
        // Predicated region
        $region73: #{tpu_custom_call.1} parent=23 // pred_check
          %p735 = pneg %p734
        $region74: #{tpu_custom_call.1} parent=23 // pred_check_branch
          %737 = sbr.rel (%p735) target = $region76
        $region75: #{tpu_custom_call.1} parent=23 // pred_region
          %v738 = vld [vmem:[#allocation2] sm:$0xff]
          %v739 = vld [vmem:[#allocation2 + $0x8] sm:$0xff]
          %v740 = vld [vmem:[#allocation2 + $0x10] sm:$0xff]
          %v741 = vld [vmem:[#allocation2 + $0x18] sm:$0xff]
          %v742 = vld [vmem:[#allocation2 + $0x20] sm:$0xff]
          %v743 = vld [vmem:[#allocation2 + $0x28] sm:$0xff]
          %v744 = vld [vmem:[#allocation2 + $0x30] sm:$0xff]
          %v745 = vld [vmem:[#allocation2 + $0x38] sm:$0xff]
          %754 = vrot.lane.b32.xlu0 %v738, 127
          %v755 = vpop.permute.xlu0 %754
          %756 = vrot.lane.b32.xlu0 %v739, 127
          %v757 = vpop.permute.xlu0 %756
          %758 = vrot.lane.b32.xlu0 %v740, 127
          %v759 = vpop.permute.xlu0 %758
          %760 = vrot.lane.b32.xlu0 %v741, 127
          %v761 = vpop.permute.xlu0 %760
          %762 = vrot.lane.b32.xlu0 %v742, 127
          %v763 = vpop.permute.xlu0 %762
          %764 = vrot.lane.b32.xlu0 %v743, 127
          %v765 = vpop.permute.xlu0 %764
          %766 = vrot.lane.b32.xlu0 %v744, 127
          %v767 = vpop.permute.xlu0 %766
          %768 = vrot.lane.b32.xlu0 %v745, 127
          %v769 = vpop.permute.xlu0 %768
          %vm778 = vcmask 121856
          %779 = vst.msk [vmem:[%s139] sm:$0xff] %vm778, %v755
          %780 = vst.msk [vmem:[%s139 + $0x8] sm:$0xff] %vm778, %v757
          %781 = vst.msk [vmem:[%s139 + $0x10] sm:$0xff] %vm778, %v759
          %782 = vst.msk [vmem:[%s139 + $0x18] sm:$0xff] %vm778, %v761
          %783 = vst.msk [vmem:[%s139 + $0x20] sm:$0xff] %vm778, %v763
          %784 = vst.msk [vmem:[%s139 + $0x28] sm:$0xff] %vm778, %v765
          %785 = vst.msk [vmem:[%s139 + $0x30] sm:$0xff] %vm778, %v767
          %786 = vst.msk [vmem:[%s139 + $0x38] sm:$0xff] %vm778, %v769
          %v787 = vld [vmem:[#allocation2] sm:$0xff]
          %v788 = vld [vmem:[#allocation2 + $0x8] sm:$0xff]
          %v789 = vld [vmem:[#allocation2 + $0x10] sm:$0xff]
          %v790 = vld [vmem:[#allocation2 + $0x18] sm:$0xff]
          %v791 = vld [vmem:[#allocation2 + $0x20] sm:$0xff]
          %v792 = vld [vmem:[#allocation2 + $0x28] sm:$0xff]
          %v793 = vld [vmem:[#allocation2 + $0x30] sm:$0xff]
          %v794 = vld [vmem:[#allocation2 + $0x38] sm:$0xff]
          %vm795 = vcmask 130168
          %796 = vst.msk [vmem:[%s139] sm:$0xff] %vm795, %v787
          %797 = vst.msk [vmem:[%s139 + $0x8] sm:$0xff] %vm795, %v788
          %798 = vst.msk [vmem:[%s139 + $0x10] sm:$0xff] %vm795, %v789
          %799 = vst.msk [vmem:[%s139 + $0x18] sm:$0xff] %vm795, %v790
          %800 = vst.msk [vmem:[%s139 + $0x20] sm:$0xff] %vm795, %v791
          %801 = vst.msk [vmem:[%s139 + $0x28] sm:$0xff] %vm795, %v792
          %802 = vst.msk [vmem:[%s139 + $0x30] sm:$0xff] %vm795, %v793
          %803 = vst.msk [vmem:[%s139 + $0x38] sm:$0xff] %vm795, %v794
        $region76: #{tpu_custom_call.1} parent=23 // pred_fallthru
          _
        %p804 = scmp.eq.s32.totalorder %s145, 5
        // Predicated region
        $region77: #{tpu_custom_call.1} parent=23 // pred_check
          %p805 = pneg %p804
        $region78: #{tpu_custom_call.1} parent=23 // pred_check_branch
          %807 = sbr.rel (%p805) target = $region80
        $region79: #{tpu_custom_call.1} parent=23 // pred_region
          %v808 = vld [vmem:[#allocation2] sm:$0xff]
          %v809 = vld [vmem:[#allocation2 + $0x8] sm:$0xff]
          %v810 = vld [vmem:[#allocation2 + $0x10] sm:$0xff]
          %v811 = vld [vmem:[#allocation2 + $0x18] sm:$0xff]
          %v812 = vld [vmem:[#allocation2 + $0x20] sm:$0xff]
          %v813 = vld [vmem:[#allocation2 + $0x28] sm:$0xff]
          %v814 = vld [vmem:[#allocation2 + $0x30] sm:$0xff]
          %v815 = vld [vmem:[#allocation2 + $0x38] sm:$0xff]
          %824 = vrot.lane.b32.xlu0 %v808, 126
          %v825 = vpop.permute.xlu0 %824
          %826 = vrot.lane.b32.xlu0 %v809, 126
          %v827 = vpop.permute.xlu0 %826
          %828 = vrot.lane.b32.xlu0 %v810, 126
          %v829 = vpop.permute.xlu0 %828
          %830 = vrot.lane.b32.xlu0 %v811, 126
          %v831 = vpop.permute.xlu0 %830
          %832 = vrot.lane.b32.xlu0 %v812, 126
          %v833 = vpop.permute.xlu0 %832
          %834 = vrot.lane.b32.xlu0 %v813, 126
          %v835 = vpop.permute.xlu0 %834
          %836 = vrot.lane.b32.xlu0 %v814, 126
          %v837 = vpop.permute.xlu0 %836
          %838 = vrot.lane.b32.xlu0 %v815, 126
          %v839 = vpop.permute.xlu0 %838
          %vm848 = vcmask 113664
          %849 = vst.msk [vmem:[%s139] sm:$0xff] %vm848, %v825
          %850 = vst.msk [vmem:[%s139 + $0x8] sm:$0xff] %vm848, %v827
          %851 = vst.msk [vmem:[%s139 + $0x10] sm:$0xff] %vm848, %v829
          %852 = vst.msk [vmem:[%s139 + $0x18] sm:$0xff] %vm848, %v831
          %853 = vst.msk [vmem:[%s139 + $0x20] sm:$0xff] %vm848, %v833
          %854 = vst.msk [vmem:[%s139 + $0x28] sm:$0xff] %vm848, %v835
          %855 = vst.msk [vmem:[%s139 + $0x30] sm:$0xff] %vm848, %v837
          %856 = vst.msk [vmem:[%s139 + $0x38] sm:$0xff] %vm848, %v839
          %v857 = vld [vmem:[#allocation2] sm:$0xff]
          %v858 = vld [vmem:[#allocation2 + $0x8] sm:$0xff]
          %v859 = vld [vmem:[#allocation2 + $0x10] sm:$0xff]
          %v860 = vld [vmem:[#allocation2 + $0x18] sm:$0xff]
          %v861 = vld [vmem:[#allocation2 + $0x20] sm:$0xff]
          %v862 = vld [vmem:[#allocation2 + $0x28] sm:$0xff]
          %v863 = vld [vmem:[#allocation2 + $0x30] sm:$0xff]
          %v864 = vld [vmem:[#allocation2 + $0x38] sm:$0xff]
          %866 = vset.pattern.permute.xlu0 15
          %867 = vperm.xlu0 %866, %v857
          %v868 = vpop.permute.xlu0 %867
          %871 = vset.pattern.permute.xlu0 15
          %872 = vperm.xlu0 %871, %v858
          %v873 = vpop.permute.xlu0 %872
          %876 = vset.pattern.permute.xlu0 15
          %877 = vperm.xlu0 %876, %v859
          %v878 = vpop.permute.xlu0 %877
          %881 = vset.pattern.permute.xlu0 15
          %882 = vperm.xlu0 %881, %v860
          %v883 = vpop.permute.xlu0 %882
          %886 = vset.pattern.permute.xlu0 15
          %887 = vperm.xlu0 %886, %v861
          %v888 = vpop.permute.xlu0 %887
          %891 = vset.pattern.permute.xlu0 15
          %892 = vperm.xlu0 %891, %v862
          %v893 = vpop.permute.xlu0 %892
          %896 = vset.pattern.permute.xlu0 15
          %897 = vperm.xlu0 %896, %v863
          %v898 = vpop.permute.xlu0 %897
          %901 = vset.pattern.permute.xlu0 15
          %902 = vperm.xlu0 %901, %v864
          %v903 = vpop.permute.xlu0 %902
          %vm905 = vcmask 130160
          %906 = vst.msk [vmem:[%s139] sm:$0xff] %vm905, %v868
          %907 = vst.msk [vmem:[%s139 + $0x8] sm:$0xff] %vm905, %v873
          %908 = vst.msk [vmem:[%s139 + $0x10] sm:$0xff] %vm905, %v878
          %909 = vst.msk [vmem:[%s139 + $0x18] sm:$0xff] %vm905, %v883
          %910 = vst.msk [vmem:[%s139 + $0x20] sm:$0xff] %vm905, %v888
          %911 = vst.msk [vmem:[%s139 + $0x28] sm:$0xff] %vm905, %v893
          %912 = vst.msk [vmem:[%s139 + $0x30] sm:$0xff] %vm905, %v898
          %913 = vst.msk [vmem:[%s139 + $0x38] sm:$0xff] %vm905, %v903
        $region80: #{tpu_custom_call.1} parent=23 // pred_fallthru
          _
        %p914 = scmp.eq.s32.totalorder %s145, 6
        // Predicated region
        $region81: #{tpu_custom_call.1} parent=23 // pred_check
          %p915 = pneg %p914
        $region82: #{tpu_custom_call.1} parent=23 // pred_check_branch
          %917 = sbr.rel (%p915) target = $region84
        $region83: #{tpu_custom_call.1} parent=23 // pred_region
          %v918 = vld [vmem:[#allocation2] sm:$0xff]
          %v919 = vld [vmem:[#allocation2 + $0x8] sm:$0xff]
          %v920 = vld [vmem:[#allocation2 + $0x10] sm:$0xff]
          %v921 = vld [vmem:[#allocation2 + $0x18] sm:$0xff]
          %v922 = vld [vmem:[#allocation2 + $0x20] sm:$0xff]
          %v923 = vld [vmem:[#allocation2 + $0x28] sm:$0xff]
          %v924 = vld [vmem:[#allocation2 + $0x30] sm:$0xff]
          %v925 = vld [vmem:[#allocation2 + $0x38] sm:$0xff]
          %934 = vrot.lane.b32.xlu0 %v918, 125
          %v935 = vpop.permute.xlu0 %934
          %936 = vrot.lane.b32.xlu0 %v919, 125
          %v937 = vpop.permute.xlu0 %936
          %938 = vrot.lane.b32.xlu0 %v920, 125
          %v939 = vpop.permute.xlu0 %938
          %940 = vrot.lane.b32.xlu0 %v921, 125
          %v941 = vpop.permute.xlu0 %940
          %942 = vrot.lane.b32.xlu0 %v922, 125
          %v943 = vpop.permute.xlu0 %942
          %944 = vrot.lane.b32.xlu0 %v923, 125
          %v945 = vpop.permute.xlu0 %944
          %946 = vrot.lane.b32.xlu0 %v924, 125
          %v947 = vpop.permute.xlu0 %946
          %948 = vrot.lane.b32.xlu0 %v925, 125
          %v949 = vpop.permute.xlu0 %948
          %vm958 = vcmask 105472
          %959 = vst.msk [vmem:[%s139] sm:$0xff] %vm958, %v935
          %960 = vst.msk [vmem:[%s139 + $0x8] sm:$0xff] %vm958, %v937
          %961 = vst.msk [vmem:[%s139 + $0x10] sm:$0xff] %vm958, %v939
          %962 = vst.msk [vmem:[%s139 + $0x18] sm:$0xff] %vm958, %v941
          %963 = vst.msk [vmem:[%s139 + $0x20] sm:$0xff] %vm958, %v943
          %964 = vst.msk [vmem:[%s139 + $0x28] sm:$0xff] %vm958, %v945
          %965 = vst.msk [vmem:[%s139 + $0x30] sm:$0xff] %vm958, %v947
          %966 = vst.msk [vmem:[%s139 + $0x38] sm:$0xff] %vm958, %v949
          %v967 = vld [vmem:[#allocation2] sm:$0xff]
          %v968 = vld [vmem:[#allocation2 + $0x8] sm:$0xff]
          %v969 = vld [vmem:[#allocation2 + $0x10] sm:$0xff]
          %v970 = vld [vmem:[#allocation2 + $0x18] sm:$0xff]
          %v971 = vld [vmem:[#allocation2 + $0x20] sm:$0xff]
          %v972 = vld [vmem:[#allocation2 + $0x28] sm:$0xff]
          %v973 = vld [vmem:[#allocation2 + $0x30] sm:$0xff]
          %v974 = vld [vmem:[#allocation2 + $0x38] sm:$0xff]
          %976 = vset.pattern.permute.xlu0 15
          %977 = vperm.xlu0 %976, %v967
          %v978 = vpop.permute.xlu0 %977
          %981 = vset.pattern.permute.xlu0 15
          %982 = vperm.xlu0 %981, %v968
          %v983 = vpop.permute.xlu0 %982
          %986 = vset.pattern.permute.xlu0 15
          %987 = vperm.xlu0 %986, %v969
          %v988 = vpop.permute.xlu0 %987
          %991 = vset.pattern.permute.xlu0 15
          %992 = vperm.xlu0 %991, %v970
          %v993 = vpop.permute.xlu0 %992
          %996 = vset.pattern.permute.xlu0 15
          %997 = vperm.xlu0 %996, %v971
          %v998 = vpop.permute.xlu0 %997
          %1001 = vset.pattern.permute.xlu0 15
          %1002 = vperm.xlu0 %1001, %v972
          %v1003 = vpop.permute.xlu0 %1002
          %1006 = vset.pattern.permute.xlu0 15
          %1007 = vperm.xlu0 %1006, %v973
          %v1008 = vpop.permute.xlu0 %1007
          %1011 = vset.pattern.permute.xlu0 15
          %1012 = vperm.xlu0 %1011, %v974
          %v1013 = vpop.permute.xlu0 %1012
          %vm1015 = vcmask 130152
          %1016 = vst.msk [vmem:[%s139] sm:$0xff] %vm1015, %v978
          %1017 = vst.msk [vmem:[%s139 + $0x8] sm:$0xff] %vm1015, %v983
          %1018 = vst.msk [vmem:[%s139 + $0x10] sm:$0xff] %vm1015, %v988
          %1019 = vst.msk [vmem:[%s139 + $0x18] sm:$0xff] %vm1015, %v993
          %1020 = vst.msk [vmem:[%s139 + $0x20] sm:$0xff] %vm1015, %v998
          %1021 = vst.msk [vmem:[%s139 + $0x28] sm:$0xff] %vm1015, %v1003
          %1022 = vst.msk [vmem:[%s139 + $0x30] sm:$0xff] %vm1015, %v1008
          %1023 = vst.msk [vmem:[%s139 + $0x38] sm:$0xff] %vm1015, %v1013
        $region84: #{tpu_custom_call.1} parent=23 // pred_fallthru
          _
        %s1024 = sand.u32 %s57, 1
        %s1025 = scalar_lea.sflag [#allocation7], %s1024
        %s1026 = sand.u32 %s57, 1
        %s1027 = smul.addr %s1026, 64
        %s1028 = scalar_lea.vmem [#allocation8], %s1027
        // Predicated region
        $region85: #{tpu_custom_call.1} parent=23 // pred_check
          %p1029 = pneg %p67
        $region86: #{tpu_custom_call.1} parent=23 // pred_check_branch
          %1031 = sbr.rel (%p1029) target = $region88
        $region87: #{tpu_custom_call.1} parent=23 // pred_region
          %s1033 = ssub.s32 1024, 1024
          %1034 = vsyncadd %s1025, %s1033
          %s1035 = smul.addr %s23, 8
          %s1036 = smul.addr %s1035, 128
          %s1037 = scalar_lea.hbm %s2, %s1036
          %s1038 = sshll.u32 %s1028, 4
          %s1039 = int_to_ptr.vmem [resolvable:$true] %s1038
          %1044 = dma.vmem_to_hbm [thread:$0]  %s1039, 1024, %s1037, %s1025, 128, 128, 8
        $region88: #{tpu_custom_call.1} parent=23 // pred_fallthru
          _
      $region24: #{tpu_custom_call.1} parent=5 // pred_fallthru
        _
      %p1045 = scmp.le.s32.totalorder 2, %s18
      // Predicated region
      $region89: #{tpu_custom_call.1} parent=5 // pred_check
        %p1046 = pneg %p1045
      $region90: #{tpu_custom_call.1} parent=5 // pred_check_branch
        %1048 = sbr.rel (%p1046) target = $region92
      $region91: #{tpu_custom_call.1} parent=5 // pred_region
        %s1049 = ssub.s32 %s18, 2
        // Predicated region
        $region93: #{tpu_custom_call.1} parent=91 // pred_check
          %p1050 = pneg %p73
        $region94: #{tpu_custom_call.1} parent=91 // pred_check_branch
          %1052 = sbr.rel (%p1050) target = $region96
        $region95: #{tpu_custom_call.1} parent=91 // pred_region
          %s1053 = sand.u32 %s58, 1
          %s1054 = scalar_lea.sflag [#allocation7], %s1053
          %s1055 = sand.u32 %s58, 1
          %s1056 = smul.addr %s1055, 64
          %s1057 = scalar_lea.vmem [#allocation8], %s1056
          %1058 = dma.done %s1054, 1024
        $region96: #{tpu_custom_call.1} parent=91 // pred_fallthru
          _
      $region92: #{tpu_custom_call.1} parent=5 // pred_fallthru
        _
    $region6: #{tpu_custom_call.1} parent=1 // loop_footer
      %s22 = sadd.s32 1, %s18
    $region7: #{tpu_custom_call.1} parent=1 // loop_footer_branch
      %17 = sbr.rel target = $region3
    $region8: #{tpu_custom_call.1} parent=1 // loop_exit
      _
    %1059 = vsyncpa [#allocation6], 1
    %s1060 = scalar_lea.sflag [#allocation6], 1
    %1061 = vsyncpa %s1060, 1
    %1062 = vsyncpa [#allocation7], 1
    %s1063 = scalar_lea.sflag [#allocation7], 1
    %1064 = vsyncpa %s1063, 1

</llo_original>
